<compile_context>
chip_gen: v6e
topology: v6e:2x2x1
jax: 0.10.0
libtpu: 0.0.40
codegen_flags: <defaults>
</compile_context>

<pallas_src>
import jax
import jax.numpy as jnp
from jax.experimental import pallas as pl
from jax.experimental.pallas import tpu as pltpu

_LANE = 128     # lane width (last-dim tiling unit)
_SUBLANE = 8    # sublane count (second-to-last-dim tiling unit)


def _round_up(x, m):
    return (x + m - 1) // m * m


def projection_kernel(x_ref, w1_ref, w2_ref, w3_ref, bias_ref, o_ref):
    """Fused MLP: ReLU(ReLU(ReLU(x@W1+b1)@W2+b2)@W3+b3).

    x arrives f32 and is cast to bf16 in-register (no wrapper cast pass over
    HBM). Weights arrive pre-padded bf16. Every matmul accumulates in f32
    (preferred_element_type); bias-add / ReLU run in f32 on the VPU.
    bias_ref is a (3, max_dim) slab: row 0 = b1, row 1 = b2, row 2 = b3.
    """
    hid_p = w1_ref.shape[1]
    out_p = w3_ref.shape[1]
    x = x_ref[...].astype(jnp.bfloat16)
    h = jnp.dot(x, w1_ref[...], preferred_element_type=jnp.float32)
    h = jnp.maximum(h + bias_ref[0:1, :hid_p], 0.0)
    h = jnp.dot(h.astype(jnp.bfloat16), w2_ref[...],
                preferred_element_type=jnp.float32)
    h = jnp.maximum(h + bias_ref[1:2, :hid_p], 0.0)
    h = jnp.dot(h.astype(jnp.bfloat16), w3_ref[...],
                preferred_element_type=jnp.float32)
    h = jnp.maximum(h + bias_ref[2:3, :out_p], 0.0)
    o_ref[...] = h.astype(o_ref.dtype)


def prepare_params(params):
    """One-time (init-time) padding + bf16 cast of the Linear parameters.

    params: dict with f32 "w1","b1","w2","b2","w3","b3"; weights stored
    (in_features, out_features), biases (1, out_features).
    Returns a dict consumed by projection_forward.
    """
    w1, b1 = params["w1"], params["b1"]
    w2, b2 = params["w2"], params["b2"]
    w3, b3 = params["w3"], params["b3"]
    c_in, hidden = w1.shape
    c_out = w3.shape[1]
    hid_p = _round_up(hidden, _LANE)
    out_p = _round_up(c_out, _LANE)
    max_p = max(hid_p, out_p)

    def pad2(a, rows, cols):
        return jnp.pad(a, ((0, rows - a.shape[0]), (0, cols - a.shape[1])))

    bias = jnp.concatenate(
        [pad2(b1.reshape(1, -1), 1, max_p),
         pad2(b2.reshape(1, -1), 1, max_p),
         pad2(b3.reshape(1, -1), 1, max_p)], axis=0).astype(jnp.float32)

    return {
        "w1": pad2(w1, c_in, hid_p).astype(jnp.bfloat16),
        "w2": pad2(w2, hid_p, hid_p).astype(jnp.bfloat16),
        "w3": pad2(w3, hid_p, out_p).astype(jnp.bfloat16),
        "bias": bias,
        "dims": (c_in, hidden, c_out, hid_p, out_p),   # static Python ints
    }


def _choose_batch_tile(B, tile_b):
    """Pick (batch tile, padded batch).

    Prefers tiles that divide B exactly (no wrapper-side pad pass over x) and
    >= 2 grid steps when the batch allows it (so the 'parallel' axis shards
    across both TensorCores on v7x). Large-batch tiles are 256-multiples
    (fills the 2x256x256 MXUs on v6e/v7x; v5e is saturated at 128 anyway).
    """
    tile_b = max(_SUBLANE, (tile_b // _SUBLANE) * _SUBLANE)
    if B <= tile_b:
        half = B // 2
        if B >= 2 * _SUBLANE and half % _SUBLANE == 0:
            return half, B          # two grid steps, no padding
        return B, B                 # single full-extent block, no padding
    tb = min(tile_b, _round_up(pl.cdiv(B, 2), 256))
    return tb, _round_up(B, tb)


def projection_forward(x, prepared, *, tile_b=512, out_dtype=None):
    """Apply the Projection head.

    x: (B, c_in) or (B, C, H, W) float32 (flattened like inputs.view(B, -1)).
    prepared: output of prepare_params (padded bf16 weights, f32 bias slab).
    Returns (B, c_out) in out_dtype (defaults to x.dtype).
    """
    if x.ndim > 2:
        x = x.reshape(x.shape[0], -1)      # == inputs.view(B, -1); free (row-major)
    B, c_in = x.shape
    c_in_w, _hidden, c_out, hid_p, out_p = prepared["dims"]
    if c_in != c_in_w:
        raise ValueError(f"x has {c_in} features, params expect {c_in_w}")
    max_p = max(hid_p, out_p)
    out_dtype = x.dtype if out_dtype is None else jnp.dtype(out_dtype)
    out_itemsize = jnp.dtype(out_dtype).itemsize

    tb, B_p = _choose_batch_tile(B, tile_b)
    # Batch pad only when the tile does not divide B (rare); feature dims are
    # never padded/cast in the wrapper, so there is no extra HBM pass over x.
    x_in = x if B_p == B else jnp.pad(x, ((0, B_p - B), (0, 0)))
    grid = (B_p // tb,)

    flops = 2 * B_p * (c_in * hid_p + hid_p * hid_p + hid_p * out_p)
    bytes_accessed = (
        B_p * c_in * x.dtype.itemsize
        + (c_in * hid_p + hid_p * hid_p + hid_p * out_p) * 2
        + 3 * max_p * 4
        + B_p * out_p * out_itemsize)

    # VMEM budget: double-buffered x/out tiles + weights (assume worst-case
    # double-buffering so the fallback path also fits) + f32 intermediates,
    # with 2x headroom, clamped to 64 MiB (v7x physical VMEM).
    needed = (2 * tb * c_in * x.dtype.itemsize
              + 2 * tb * out_p * out_itemsize
              + 2 * (c_in * hid_p + hid_p * hid_p + hid_p * out_p) * 2
              + 2 * 3 * max_p * 4
              + 4 * tb * max_p * 4)
    vmem_limit = int(min(max(2 * needed, 32 << 20), 64 << 20))
    # NOTE (v7x): if c_in grows large enough that the resident w1 no longer
    # fits this budget, the right fix is an innermost "arbitrary" K axis
    # streaming x/w1 tiles into an f32 accumulator instead of full residency.

    def _run(weight_pipeline_mode):
        def resident(shape):
            if weight_pipeline_mode is None:
                return pl.BlockSpec(shape, lambda i: (0,) * len(shape))
            return pl.BlockSpec(shape, lambda i: (0,) * len(shape),
                                pipeline_mode=weight_pipeline_mode)

        return pl.pallas_call(
            projection_kernel,
            out_shape=jax.ShapeDtypeStruct((B_p, out_p), out_dtype),
            grid=grid,
            in_specs=[
                pl.BlockSpec((tb, c_in), lambda i: (i, 0)),   # x: tiled over B
                resident((c_in, hid_p)),                      # W1 (resident)
                resident((hid_p, hid_p)),                     # W2 (resident)
                resident((hid_p, out_p)),                     # W3 (resident)
                resident((3, max_p)),                         # bias slab
            ],
            out_specs=pl.BlockSpec((tb, out_p), lambda i: (i, 0)),
            compiler_params=pltpu.CompilerParams(
                dimension_semantics=("parallel",),
                vmem_limit_bytes=vmem_limit),
            cost_estimate=pl.CostEstimate(
                flops=flops, transcendentals=0,
                bytes_accessed=bytes_accessed),
        )(x_in, prepared["w1"], prepared["w2"], prepared["w3"],
          prepared["bias"])

    try:
        # Single-buffer the grid-invariant weights/biases (halves their VMEM
        # residency; important on v7x's 64 MiB VMEM).
        out = _run(pl.Buffered(1))
    except Exception:
        # Fallback: this lowering rejected single-buffered pipeline_mode;
        # default double-buffered resident blocks are still correct.
        out = _run(None)

    # Strip batch/lane padding. c_out stays padded to 128 lanes inside the
    # kernel (unmasked lane-dense stores); consumers that can accept the
    # padded slab should use `out` directly to avoid this extra pass.
    return out[:B, :c_out]


def init_params(key, c_in, hidden_dim, c_out):
    """Synthetic init matching nn.Linear shapes (weight (out,in), bias (out,)),
    stored transposed as (in,out) for x@W."""
    ks = jax.random.split(key, 6)

    def linear(kw, kb, fan_in, fan_out):
        bound = 1.0 / jnp.sqrt(fan_in)
        w = jax.random.uniform(kw, (fan_in, fan_out), jnp.float32, -bound, bound)
        b = jax.random.uniform(kb, (1, fan_out), jnp.float32, -bound, bound)
        return w, b

    w1, b1 = linear(ks[0], ks[1], c_in, hidden_dim)
    w2, b2 = linear(ks[2], ks[3], hidden_dim, hidden_dim)
    w3, b3 = linear(ks[4], ks[5], hidden_dim, c_out)
    return {"w1": w1, "b1": b1, "w2": w2, "b2": b2, "w3": w3, "b3": b3}


def reference_forward(x, params, *, match_bf16=False):
    """Pure-JAX reference. match_bf16=True mimics the kernel's bf16 MXU
    operands (f32 accumulation) so the comparison tolerance can be tight."""
    cast = (lambda a: a.astype(jnp.bfloat16)) if match_bf16 else (lambda a: a)

    def layer(h, w, b):
        y = jnp.dot(cast(h), cast(w), preferred_element_type=jnp.float32) + b
        return jnp.maximum(y, 0.0)

    h = layer(x, params["w1"], params["b1"])
    h = layer(h, params["w2"], params["b2"])
    h = layer(h, params["w3"], params["b3"])
    return h


if __name__ == "__main__":
    key = jax.random.PRNGKey(0)
    k_in, k_p = jax.random.split(key)

    # NCHW input like the PyTorch module would receive, then flattened.
    B, C, H, W = 2, 4, 16, 16
    c_in = C * H * W          # 1024
    hidden_dim = 32
    c_out = 16

    x_nchw = jax.random.normal(k_in, (B, C, H, W), jnp.float32)
    raw_params = init_params(k_p, c_in, hidden_dim, c_out)
    params = prepare_params(raw_params)   # pad/cast ONCE at init, not per call

    out = projection_forward(x_nchw, params)
    out = jax.block_until_ready(out)
    assert out.shape == (B, c_out)

    x_flat = x_nchw.reshape(B, -1)        # == inputs.view(B, -1)
    ref_bf16 = reference_forward(x_flat, raw_params, match_bf16=True)
    ref_f32 = reference_forward(x_flat, raw_params, match_bf16=False)

    # Tight check against a bf16-operand reference (same numerics as kernel),
    # looser sanity check against the full-f32 reference (bf16 operand error).
    assert jnp.allclose(out, ref_bf16, atol=1e-3, rtol=1e-3)
    assert jnp.allclose(out, ref_f32, atol=3e-2, rtol=3e-2)

    print("KERNEL_OK")
</pallas_src>

<mosaic_0001>
module attributes {stable_mosaic.version = 11 : i64} {
  func.func @projection_kernel(%arg0: i32, %arg1: memref<2x1024xf32, #tpu.memory_space<vmem>>, %arg2: memref<1024x128xbf16, #tpu.memory_space<vmem>>, %arg3: memref<128x128xbf16, #tpu.memory_space<vmem>>, %arg4: memref<128x128xbf16, #tpu.memory_space<vmem>>, %arg5: memref<3x128xf32, #tpu.memory_space<vmem>>, %arg6: memref<2x128xf32, #tpu.memory_space<vmem>>) attributes {dimension_semantics = [#tpu.dimension_semantics<parallel>], iteration_bounds = array<i64: 1>, scalar_prefetch = 0 : i64, scratch_operands = 0 : i64, tpu.core_type = #tpu.core_type<tc>, window_params = [{transform_indices = @transform_0, window_bounds = array<i64: 2, 1024>}, {pipeline_mode = #tpu.pipeline_mode<synchronous>, transform_indices = @transform_1, window_bounds = array<i64: 1024, 128>}, {pipeline_mode = #tpu.pipeline_mode<synchronous>, transform_indices = @transform_2, window_bounds = array<i64: 128, 128>}, {pipeline_mode = #tpu.pipeline_mode<synchronous>, transform_indices = @transform_3, window_bounds = array<i64: 128, 128>}, {pipeline_mode = #tpu.pipeline_mode<synchronous>, transform_indices = @transform_4, window_bounds = array<i64: 3, 128>}, {transform_indices = @transform_5, window_bounds = array<i64: 2, 128>}]} {
    %c0 = arith.constant 0 : index
    %c0_0 = arith.constant 0 : index
    %0 = vector.load %arg1[%c0, %c0_0] : memref<2x1024xf32, #tpu.memory_space<vmem>>, vector<2x1024xf32>
    %1 = arith.truncf %0 : vector<2x1024xf32> to vector<2x1024xbf16>
    %c0_1 = arith.constant 0 : index
    %c0_2 = arith.constant 0 : index
    %2 = vector.load %arg2[%c0_1, %c0_2] : memref<1024x128xbf16, #tpu.memory_space<vmem>>, vector<1024x128xbf16>
    %cst = arith.constant dense<0.000000e+00> : vector<2x128xf32>
    %3 = tpu.matmul %1, %2, %cst {dimension_numbers = #tpu.dot_dimension_numbers<[1], [0], [0], [1], [0, 0, 1, 1], [], []>} : vector<2x1024xbf16>, vector<1024x128xbf16>, vector<2x128xf32> -> vector<2x128xf32>
    %c0_3 = arith.constant 0 : index
    %c0_4 = arith.constant 0 : index
    %4 = vector.load %arg5[%c0_3, %c0_4] : memref<3x128xf32, #tpu.memory_space<vmem>>, vector<1x128xf32>
    %5 = vector.broadcast %4 : vector<1x128xf32> to vector<2x128xf32>
    %6 = arith.addf %3, %5 : vector<2x128xf32>
    %cst_5 = arith.constant 0.000000e+00 : f32
    %7 = vector.broadcast %cst_5 : f32 to vector<2x128xf32>
    %8 = arith.maximumf %6, %7 : vector<2x128xf32>
    %9 = arith.truncf %8 : vector<2x128xf32> to vector<2x128xbf16>
    %c0_6 = arith.constant 0 : index
    %c0_7 = arith.constant 0 : index
    %10 = vector.load %arg3[%c0_6, %c0_7] : memref<128x128xbf16, #tpu.memory_space<vmem>>, vector<128x128xbf16>
    %cst_8 = arith.constant dense<0.000000e+00> : vector<2x128xf32>
    %11 = tpu.matmul %9, %10, %cst_8 {dimension_numbers = #tpu.dot_dimension_numbers<[1], [0], [0], [1], [0, 0, 1, 1], [], []>} : vector<2x128xbf16>, vector<128x128xbf16>, vector<2x128xf32> -> vector<2x128xf32>
    %c1 = arith.constant 1 : index
    %c0_9 = arith.constant 0 : index
    %12 = vector.load %arg5[%c1, %c0_9] : memref<3x128xf32, #tpu.memory_space<vmem>>, vector<1x128xf32>
    %13 = vector.broadcast %12 : vector<1x128xf32> to vector<2x128xf32>
    %14 = arith.addf %11, %13 : vector<2x128xf32>
    %cst_10 = arith.constant 0.000000e+00 : f32
    %15 = vector.broadcast %cst_10 : f32 to vector<2x128xf32>
    %16 = arith.maximumf %14, %15 : vector<2x128xf32>
    %17 = arith.truncf %16 : vector<2x128xf32> to vector<2x128xbf16>
    %c0_11 = arith.constant 0 : index
    %c0_12 = arith.constant 0 : index
    %18 = vector.load %arg4[%c0_11, %c0_12] : memref<128x128xbf16, #tpu.memory_space<vmem>>, vector<128x128xbf16>
    %cst_13 = arith.constant dense<0.000000e+00> : vector<2x128xf32>
    %19 = tpu.matmul %17, %18, %cst_13 {dimension_numbers = #tpu.dot_dimension_numbers<[1], [0], [0], [1], [0, 0, 1, 1], [], []>} : vector<2x128xbf16>, vector<128x128xbf16>, vector<2x128xf32> -> vector<2x128xf32>
    %c2 = arith.constant 2 : index
    %c0_14 = arith.constant 0 : index
    %20 = vector.load %arg5[%c2, %c0_14] : memref<3x128xf32, #tpu.memory_space<vmem>>, vector<1x128xf32>
    %21 = vector.broadcast %20 : vector<1x128xf32> to vector<2x128xf32>
    %22 = arith.addf %19, %21 : vector<2x128xf32>
    %cst_15 = arith.constant 0.000000e+00 : f32
    %23 = vector.broadcast %cst_15 : f32 to vector<2x128xf32>
    %24 = arith.maximumf %22, %23 : vector<2x128xf32>
    %c0_16 = arith.constant 0 : index
    %c0_17 = arith.constant 0 : index
    %25 = vector.load %arg6[%c0_16, %c0_17] : memref<2x128xf32, #tpu.memory_space<vmem>>, vector<2x128xf32>
    tpu.vector_store %arg6[%c0_16, %c0_17], %24 {strides = array<i32>} : memref<2x128xf32, #tpu.memory_space<vmem>>, vector<2x128xf32>,
    return
  }
  func.func @transform_0(%arg0: i32) -> (i32, i32) {
    %c0_i32 = arith.constant 0 : i32
    %c0_i32_0 = arith.constant 0 : i32
    return %arg0, %c0_i32 : i32, i32
  }
  func.func @transform_1(%arg0: i32) -> (i32, i32) {
    %c0_i32 = arith.constant 0 : i32
    %c0_i32_0 = arith.constant 0 : i32
    %c0_i32_1 = arith.constant 0 : i32
    return %c0_i32, %c0_i32_0 : i32, i32
  }
  func.func @transform_2(%arg0: i32) -> (i32, i32) {
    %c0_i32 = arith.constant 0 : i32
    %c0_i32_0 = arith.constant 0 : i32
    %c0_i32_1 = arith.constant 0 : i32
    return %c0_i32, %c0_i32_0 : i32, i32
  }
  func.func @transform_3(%arg0: i32) -> (i32, i32) {
    %c0_i32 = arith.constant 0 : i32
    %c0_i32_0 = arith.constant 0 : i32
    %c0_i32_1 = arith.constant 0 : i32
    return %c0_i32, %c0_i32_0 : i32, i32
  }
  func.func @transform_4(%arg0: i32) -> (i32, i32) {
    %c0_i32 = arith.constant 0 : i32
    %c0_i32_0 = arith.constant 0 : i32
    %c0_i32_1 = arith.constant 0 : i32
    return %c0_i32, %c0_i32_0 : i32, i32
  }
  func.func @transform_5(%arg0: i32) -> (i32, i32) {
    %c0_i32 = arith.constant 0 : i32
    %c0_i32_0 = arith.constant 0 : i32
    return %arg0, %c0_i32 : i32, i32
  }
}

module attributes {stable_mosaic.version = 11 : i64} {
  func.func @projection_kernel(%arg0: i32, %arg1: memref<2x1024xf32, #tpu.memory_space<vmem>>, %arg2: memref<1024x128xbf16, #tpu.memory_space<vmem>>, %arg3: memref<128x128xbf16, #tpu.memory_space<vmem>>, %arg4: memref<128x128xbf16, #tpu.memory_space<vmem>>, %arg5: memref<3x128xf32, #tpu.memory_space<vmem>>, %arg6: memref<2x128xf32, #tpu.memory_space<vmem>>) attributes {dimension_semantics = [#tpu.dimension_semantics<parallel>], iteration_bounds = array<i64: 1>, scalar_prefetch = 0 : i64, scratch_operands = 0 : i64, tpu.core_type = #tpu.core_type<tc>, window_params = [{transform_indices = @transform_0, window_bounds = array<i64: 2, 1024>}, {pipeline_mode = #tpu.pipeline_mode<synchronous>, transform_indices = @transform_1, window_bounds = array<i64: 1024, 128>}, {pipeline_mode = #tpu.pipeline_mode<synchronous>, transform_indices = @transform_2, window_bounds = array<i64: 128, 128>}, {pipeline_mode = #tpu.pipeline_mode<synchronous>, transform_indices = @transform_3, window_bounds = array<i64: 128, 128>}, {pipeline_mode = #tpu.pipeline_mode<synchronous>, transform_indices = @transform_4, window_bounds = array<i64: 3, 128>}, {transform_indices = @transform_5, window_bounds = array<i64: 2, 128>}]} {
    %c0 = arith.constant 0 : index
    %c0_0 = arith.constant 0 : index
    %0 = vector.load %arg1[%c0, %c0_0] : memref<2x1024xf32, #tpu.memory_space<vmem>>, vector<2x1024xf32>
    %1 = arith.truncf %0 : vector<2x1024xf32> to vector<2x1024xbf16>
    %c0_1 = arith.constant 0 : index
    %c0_2 = arith.constant 0 : index
    %2 = vector.load %arg2[%c0_1, %c0_2] : memref<1024x128xbf16, #tpu.memory_space<vmem>>, vector<1024x128xbf16>
    %cst = arith.constant dense<0.000000e+00> : vector<2x128xf32>
    %3 = tpu.matmul %1, %2, %cst {dimension_numbers = #tpu.dot_dimension_numbers<[1], [0], [0], [1], [0, 0, 1, 1], [], []>} : vector<2x1024xbf16>, vector<1024x128xbf16>, vector<2x128xf32> -> vector<2x128xf32>
    %c0_3 = arith.constant 0 : index
    %c0_4 = arith.constant 0 : index
    %4 = vector.load %arg5[%c0_3, %c0_4] : memref<3x128xf32, #tpu.memory_space<vmem>>, vector<1x128xf32>
    %5 = vector.broadcast %4 : vector<1x128xf32> to vector<2x128xf32>
    %6 = arith.addf %3, %5 : vector<2x128xf32>
    %cst_5 = arith.constant 0.000000e+00 : f32
    %7 = vector.broadcast %cst_5 : f32 to vector<2x128xf32>
    %8 = arith.maximumf %6, %7 : vector<2x128xf32>
    %9 = arith.truncf %8 : vector<2x128xf32> to vector<2x128xbf16>
    %c0_6 = arith.constant 0 : index
    %c0_7 = arith.constant 0 : index
    %10 = vector.load %arg3[%c0_6, %c0_7] : memref<128x128xbf16, #tpu.memory_space<vmem>>, vector<128x128xbf16>
    %cst_8 = arith.constant dense<0.000000e+00> : vector<2x128xf32>
    %11 = tpu.matmul %9, %10, %cst_8 {dimension_numbers = #tpu.dot_dimension_numbers<[1], [0], [0], [1], [0, 0, 1, 1], [], []>} : vector<2x128xbf16>, vector<128x128xbf16>, vector<2x128xf32> -> vector<2x128xf32>
    %c1 = arith.constant 1 : index
    %c0_9 = arith.constant 0 : index
    %12 = vector.load %arg5[%c1, %c0_9] : memref<3x128xf32, #tpu.memory_space<vmem>>, vector<1x128xf32>
    %13 = vector.broadcast %12 : vector<1x128xf32> to vector<2x128xf32>
    %14 = arith.addf %11, %13 : vector<2x128xf32>
    %cst_10 = arith.constant 0.000000e+00 : f32
    %15 = vector.broadcast %cst_10 : f32 to vector<2x128xf32>
    %16 = arith.maximumf %14, %15 : vector<2x128xf32>
    %17 = arith.truncf %16 : vector<2x128xf32> to vector<2x128xbf16>
    %c0_11 = arith.constant 0 : index
    %c0_12 = arith.constant 0 : index
    %18 = vector.load %arg4[%c0_11, %c0_12] : memref<128x128xbf16, #tpu.memory_space<vmem>>, vector<128x128xbf16>
    %cst_13 = arith.constant dense<0.000000e+00> : vector<2x128xf32>
    %19 = tpu.matmul %17, %18, %cst_13 {dimension_numbers = #tpu.dot_dimension_numbers<[1], [0], [0], [1], [0, 0, 1, 1], [], []>} : vector<2x128xbf16>, vector<128x128xbf16>, vector<2x128xf32> -> vector<2x128xf32>
    %c2 = arith.constant 2 : index
    %c0_14 = arith.constant 0 : index
    %20 = vector.load %arg5[%c2, %c0_14] : memref<3x128xf32, #tpu.memory_space<vmem>>, vector<1x128xf32>
    %21 = vector.broadcast %20 : vector<1x128xf32> to vector<2x128xf32>
    %22 = arith.addf %19, %21 : vector<2x128xf32>
    %cst_15 = arith.constant 0.000000e+00 : f32
    %23 = vector.broadcast %cst_15 : f32 to vector<2x128xf32>
    %24 = arith.maximumf %22, %23 : vector<2x128xf32>
    %c0_16 = arith.constant 0 : index
    %c0_17 = arith.constant 0 : index
    %25 = vector.load %arg6[%c0_16, %c0_17] : memref<2x128xf32, #tpu.memory_space<vmem>>, vector<2x128xf32>
    tpu.vector_store %arg6[%c0_16, %c0_17], %24 {strides = array<i32>} : memref<2x128xf32, #tpu.memory_space<vmem>>, vector<2x128xf32>,
    return
  }
  func.func @transform_0(%arg0: i32) -> (i32, i32) {
    %c0_i32 = arith.constant 0 : i32
    %c0_i32_0 = arith.constant 0 : i32
    return %arg0, %c0_i32 : i32, i32
  }
  func.func @transform_1(%arg0: i32) -> (i32, i32) {
    %c0_i32 = arith.constant 0 : i32
    %c0_i32_0 = arith.constant 0 : i32
    %c0_i32_1 = arith.constant 0 : i32
    return %c0_i32, %c0_i32_0 : i32, i32
  }
  func.func @transform_2(%arg0: i32) -> (i32, i32) {
    %c0_i32 = arith.constant 0 : i32
    %c0_i32_0 = arith.constant 0 : i32
    %c0_i32_1 = arith.constant 0 : i32
    return %c0_i32, %c0_i32_0 : i32, i32
  }
  func.func @transform_3(%arg0: i32) -> (i32, i32) {
    %c0_i32 = arith.constant 0 : i32
    %c0_i32_0 = arith.constant 0 : i32
    %c0_i32_1 = arith.constant 0 : i32
    return %c0_i32, %c0_i32_0 : i32, i32
  }
  func.func @transform_4(%arg0: i32) -> (i32, i32) {
    %c0_i32 = arith.constant 0 : i32
    %c0_i32_0 = arith.constant 0 : i32
    %c0_i32_1 = arith.constant 0 : i32
    return %c0_i32, %c0_i32_0 : i32, i32
  }
  func.func @transform_5(%arg0: i32) -> (i32, i32) {
    %c0_i32 = arith.constant 0 : i32
    %c0_i32_0 = arith.constant 0 : i32
    return %arg0, %c0_i32 : i32, i32
  }
}

</mosaic_0001>

<llo_original>
// kernel: tpu_custom_call.1
$region0: #{tpu_custom_call.1}
  #allocation0 [shape = 'u32[]', space=smem, size = 0x4, offset = 0x4, fixed_abs, tag = 'smem constant byte address 0x4 - core index']
  #allocation1 [shape = 'u32[144,128]{1,0:T(1,128)}', space=vmem, size = 0x12000, scoped, tag = 'internal scratch']
  %s0 = inlined_call_operand.hbm [shape: f32[2,1024], index: 0, kind: input, shape index: {}]
  %s1 = inlined_call_operand.hbm [shape: bf16[1024,128], index: 1, kind: input, shape index: {}]
  %s2 = inlined_call_operand.hbm [shape: bf16[128,128], index: 2, kind: input, shape index: {}]
  %s3 = inlined_call_operand.hbm [shape: bf16[128,128], index: 3, kind: input, shape index: {}]
  %s4 = inlined_call_operand.vmem [shape: f32[3,128], index: 4, kind: input, shape index: {}]
  %s5 = inlined_call_operand.hbm [shape: f32[2,128], index: 5, kind: output, shape index: {}]
  %s6 = sld [smem:[#allocation0]]
  $region46: #{tpu_custom_call.1} parent=0
    _
  %s8 = ssub.s32 1, %s6
  %s9 = scalar_select 0, %s8, %s6
  $region1: #{tpu_custom_call.1} parent=0
    #allocation2 [shape = 'u8[8192]{0}', space=vmem, size = 0x2000, scoped, tag = 'input window, operand 0, single buffered']
    #allocation3 [shape = 's32[1]{0}', space=sflag, size = 0x4, scoped, tag = 'scoped memory for tpu_custom_call.1']
    #allocation4 [shape = 's32[1]{0}', space=sflag, size = 0x4, scoped, tag = 'scoped memory for tpu_custom_call.1']
    #allocation5 [shape = 'u8[262144]{0}', space=vmem, size = 0x40000, scoped, tag = 'input window, operand 1, single buffered']
    #allocation6 [shape = 's32[1]{0}', space=sflag, size = 0x4, scoped, tag = 'scoped memory for tpu_custom_call.1']
    #allocation7 [shape = 'u8[32768]{0}', space=vmem, size = 0x8000, scoped, tag = 'input window, operand 2, single buffered']
    #allocation8 [shape = 'u8[32768]{0}', space=vmem, size = 0x8000, scoped, tag = 'input window, operand 3, single buffered']
    #allocation9 [shape = 's32[1]{0}', space=sflag, size = 0x4, scoped, tag = 'scoped memory for tpu_custom_call.1']
    #allocation10 [shape = 'u8[1024]{0}', space=vmem, size = 0x400, scoped, tag = 'output window, operand 0, single buffered']
    %10 = vsyncpa [#allocation3], 0
    %11 = vsyncpa [#allocation6], 0
    %12 = vsyncpa [#allocation9], 0
    %13 = vsyncpa [#allocation4], 0
    // Predicated region
    $region2: #{tpu_custom_call.1} parent=1 // pred_check
      _
    $region3: #{tpu_custom_call.1} parent=1 // pred_check_branch
      %15 = sbr.rel (0) target = $region5
    $region4: #{tpu_custom_call.1} parent=1 // pred_region
      %s17 = ssub.s32 256, 256
      %18 = vsyncadd [#allocation3], %s17
      %s20 = sshll.u32 [#allocation2], 4
      %s21 = int_to_ptr.vmem [resolvable:$true] %s20
      %23 = dma.hbm_to_vmem [thread:$0]  %s0, 256, %s21, [#allocation3]
    $region5: #{tpu_custom_call.1} parent=1 // pred_fallthru
      _
    // Predicated region
    $region6: #{tpu_custom_call.1} parent=1 // pred_check
      _
    $region7: #{tpu_custom_call.1} parent=1 // pred_check_branch
      %25 = sbr.rel (0) target = $region9
    $region8: #{tpu_custom_call.1} parent=1 // pred_region
      %s27 = ssub.s32 8192, 8192
      %28 = vsyncadd [#allocation6], %s27
      %s29 = sshll.u32 [#allocation5], 4
      %s30 = int_to_ptr.vmem [resolvable:$true] %s29
      %35 = dma.hbm_to_vmem [thread:$0]  %s1, 8192, %s30, [#allocation6], 64, 64, 4
    $region9: #{tpu_custom_call.1} parent=1 // pred_fallthru
      _
    // Predicated region
    $region10: #{tpu_custom_call.1} parent=1 // pred_check
      _
    $region11: #{tpu_custom_call.1} parent=1 // pred_check_branch
      %37 = sbr.rel (0) target = $region13
    $region12: #{tpu_custom_call.1} parent=1 // pred_region
      %s39 = ssub.s32 1024, 1024
      %40 = vsyncadd [#allocation6], %s39
      %s41 = sshll.u32 [#allocation7], 4
      %s42 = int_to_ptr.vmem [resolvable:$true] %s41
      %47 = dma.hbm_to_vmem [thread:$0]  %s2, 1024, %s42, [#allocation6], 64, 64, 4
    $region13: #{tpu_custom_call.1} parent=1 // pred_fallthru
      _
    // Predicated region
    $region14: #{tpu_custom_call.1} parent=1 // pred_check
      _
    $region15: #{tpu_custom_call.1} parent=1 // pred_check_branch
      %49 = sbr.rel (0) target = $region17
    $region16: #{tpu_custom_call.1} parent=1 // pred_region
      %s51 = ssub.s32 1024, 1024
      %52 = vsyncadd [#allocation9], %s51
      %s53 = sshll.u32 [#allocation8], 4
      %s54 = int_to_ptr.vmem [resolvable:$true] %s53
      %59 = dma.hbm_to_vmem [thread:$0]  %s3, 1024, %s54, [#allocation9], 64, 64, 4
    $region17: #{tpu_custom_call.1} parent=1 // pred_fallthru
      _
    // Predicated region
    $region18: #{tpu_custom_call.1} parent=1 // pred_check
      _
    $region19: #{tpu_custom_call.1} parent=1 // pred_check_branch
      %61 = sbr.rel (0) target = $region21
    $region20: #{tpu_custom_call.1} parent=1 // pred_region
      _
    $region21: #{tpu_custom_call.1} parent=1 // pred_fallthru
      _
    // Predicated region
    $region22: #{tpu_custom_call.1} parent=1 // pred_check
      _
    $region23: #{tpu_custom_call.1} parent=1 // pred_check_branch
      %63 = sbr.rel (0) target = $region25
    $region24: #{tpu_custom_call.1} parent=1 // pred_region
      %64 = dma.done [#allocation3], 256
    $region25: #{tpu_custom_call.1} parent=1 // pred_fallthru
      _
    // Predicated region
    $region26: #{tpu_custom_call.1} parent=1 // pred_check
      _
    $region27: #{tpu_custom_call.1} parent=1 // pred_check_branch
      %66 = sbr.rel (0) target = $region29
    $region28: #{tpu_custom_call.1} parent=1 // pred_region
      %67 = dma.done [#allocation6], 8192
    $region29: #{tpu_custom_call.1} parent=1 // pred_fallthru
      _
    // Predicated region
    $region30: #{tpu_custom_call.1} parent=1 // pred_check
      _
    $region31: #{tpu_custom_call.1} parent=1 // pred_check_branch
      %69 = sbr.rel (0) target = $region33
    $region32: #{tpu_custom_call.1} parent=1 // pred_region
      %70 = dma.done [#allocation6], 1024
    $region33: #{tpu_custom_call.1} parent=1 // pred_fallthru
      _
    // Predicated region
    $region34: #{tpu_custom_call.1} parent=1 // pred_check
      _
    $region35: #{tpu_custom_call.1} parent=1 // pred_check_branch
      %72 = sbr.rel (0) target = $region37
    $region36: #{tpu_custom_call.1} parent=1 // pred_region
      %73 = dma.done [#allocation9], 1024
    $region37: #{tpu_custom_call.1} parent=1 // pred_fallthru
      _
    %v75 = vld [vmem:[#allocation2] sm:$0xff]
    %v76 = vld [vmem:[#allocation2 + $0x8] sm:$0xff]
    %v79 = vcombine.high %v75, %v75
    %v81 = vunpack.c.l.s4 1983009808
    %v82 = vunpack.c.0.s8 %v81
    %v83 = vlaneseq
    %v84 = vshrl.u32 %v83, 7
    %v85 = vsub.s32 %v82, %v84
    %v86 = vrot.slane %v75, %v85
    %v88 = vunpack.c.l.s4 1983009808
    %v89 = vunpack.c.0.s8 %v88
    %v90 = vlaneseq
    %v91 = vshrl.u32 %v90, 7
    %v92 = vsub.s32 %v89, %v91
    %v93 = vrot.slane %v79, %v92
    %v94 = vcombine.high %v86, %v86
    %v95 = vcombine.high %v93, %v93
    %v96 = vcombine.high %v76, %v76
    %v98 = vunpack.c.l.s4 1983009808
    %v99 = vunpack.c.0.s8 %v98
    %v100 = vlaneseq
    %v101 = vshrl.u32 %v100, 7
    %v102 = vsub.s32 %v99, %v101
    %v103 = vrot.slane %v76, %v102
    %v105 = vunpack.c.l.s4 1983009808
    %v106 = vunpack.c.0.s8 %v105
    %v107 = vlaneseq
    %v108 = vshrl.u32 %v107, 7
    %v109 = vsub.s32 %v106, %v108
    %v110 = vrot.slane %v96, %v109
    %v111 = vcombine.high %v103, %v103
    %v112 = vcombine.high %v110, %v110
    %v121 = vpack.c.bf16 %v86, %v86
    %v122 = vpack.c.bf16 %v94, %v94
    %v123 = vpack.c.bf16 %v93, %v93
    %v124 = vpack.c.bf16 %v95, %v95
    %v125 = vpack.c.bf16 %v103, %v103
    %v126 = vpack.c.bf16 %v111, %v111
    %v127 = vpack.c.bf16 %v110, %v110
    %v128 = vpack.c.bf16 %v112, %v112
    %v129 = vld [vmem:[#allocation5] sm:$0xf]
    %v130 = vld [vmem:[#allocation5 + $0x4] sm:$0xf]
    %v131 = vld [vmem:[#allocation5 + $0x8] sm:$0xf]
    %v132 = vld [vmem:[#allocation5 + $0xc] sm:$0xf]
    %v133 = vld [vmem:[#allocation5 + $0x10] sm:$0xf]
    %v134 = vld [vmem:[#allocation5 + $0x14] sm:$0xf]
    %v135 = vld [vmem:[#allocation5 + $0x18] sm:$0xf]
    %v136 = vld [vmem:[#allocation5 + $0x1c] sm:$0xf]
    %v137 = vld [vmem:[#allocation5 + $0x20] sm:$0xf]
    %v138 = vld [vmem:[#allocation5 + $0x24] sm:$0xf]
    %v139 = vld [vmem:[#allocation5 + $0x28] sm:$0xf]
    %v140 = vld [vmem:[#allocation5 + $0x2c] sm:$0xf]
    %v141 = vld [vmem:[#allocation5 + $0x30] sm:$0xf]
    %v142 = vld [vmem:[#allocation5 + $0x34] sm:$0xf]
    %v143 = vld [vmem:[#allocation5 + $0x38] sm:$0xf]
    %v144 = vld [vmem:[#allocation5 + $0x3c] sm:$0xf]
    %v145 = vld [vmem:[#allocation5 + $0x40] sm:$0xf]
    %v146 = vld [vmem:[#allocation5 + $0x44] sm:$0xf]
    %v147 = vld [vmem:[#allocation5 + $0x48] sm:$0xf]
    %v148 = vld [vmem:[#allocation5 + $0x4c] sm:$0xf]
    %v149 = vld [vmem:[#allocation5 + $0x50] sm:$0xf]
    %v150 = vld [vmem:[#allocation5 + $0x54] sm:$0xf]
    %v151 = vld [vmem:[#allocation5 + $0x58] sm:$0xf]
    %v152 = vld [vmem:[#allocation5 + $0x5c] sm:$0xf]
    %v153 = vld [vmem:[#allocation5 + $0x60] sm:$0xf]
    %v154 = vld [vmem:[#allocation5 + $0x64] sm:$0xf]
    %v155 = vld [vmem:[#allocation5 + $0x68] sm:$0xf]
    %v156 = vld [vmem:[#allocation5 + $0x6c] sm:$0xf]
    %v157 = vld [vmem:[#allocation5 + $0x70] sm:$0xf]
    %v158 = vld [vmem:[#allocation5 + $0x74] sm:$0xf]
    %v159 = vld [vmem:[#allocation5 + $0x78] sm:$0xf]
    %v160 = vld [vmem:[#allocation5 + $0x7c] sm:$0xf]
    %v161 = vld [vmem:[#allocation5 + $0x80] sm:$0xf]
    %v162 = vld [vmem:[#allocation5 + $0x84] sm:$0xf]
    %v163 = vld [vmem:[#allocation5 + $0x88] sm:$0xf]
    %v164 = vld [vmem:[#allocation5 + $0x8c] sm:$0xf]
    %v165 = vld [vmem:[#allocation5 + $0x90] sm:$0xf]
    %v166 = vld [vmem:[#allocation5 + $0x94] sm:$0xf]
    %v167 = vld [vmem:[#allocation5 + $0x98] sm:$0xf]
    %v168 = vld [vmem:[#allocation5 + $0x9c] sm:$0xf]
    %v169 = vld [vmem:[#allocation5 + $0xa0] sm:$0xf]
    %v170 = vld [vmem:[#allocation5 + $0xa4] sm:$0xf]
    %v171 = vld [vmem:[#allocation5 + $0xa8] sm:$0xf]
    %v172 = vld [vmem:[#allocation5 + $0xac] sm:$0xf]
    %v173 = vld [vmem:[#allocation5 + $0xb0] sm:$0xf]
    %v174 = vld [vmem:[#allocation5 + $0xb4] sm:$0xf]
    %v175 = vld [vmem:[#allocation5 + $0xb8] sm:$0xf]
    %v176 = vld [vmem:[#allocation5 + $0xbc] sm:$0xf]
    %v177 = vld [vmem:[#allocation5 + $0xc0] sm:$0xf]
    %v178 = vld [vmem:[#allocation5 + $0xc4] sm:$0xf]
    %v179 = vld [vmem:[#allocation5 + $0xc8] sm:$0xf]
    %v180 = vld [vmem:[#allocation5 + $0xcc] sm:$0xf]
    %v181 = vld [vmem:[#allocation5 + $0xd0] sm:$0xf]
    %v182 = vld [vmem:[#allocation5 + $0xd4] sm:$0xf]
    %v183 = vld [vmem:[#allocation5 + $0xd8] sm:$0xf]
    %v184 = vld [vmem:[#allocation5 + $0xdc] sm:$0xf]
    %v185 = vld [vmem:[#allocation5 + $0xe0] sm:$0xf]
    %v186 = vld [vmem:[#allocation5 + $0xe4] sm:$0xf]
    %v187 = vld [vmem:[#allocation5 + $0xe8] sm:$0xf]
    %v188 = vld [vmem:[#allocation5 + $0xec] sm:$0xf]
    %v189 = vld [vmem:[#allocation5 + $0xf0] sm:$0xf]
    %v190 = vld [vmem:[#allocation5 + $0xf4] sm:$0xf]
    %v191 = vld [vmem:[#allocation5 + $0xf8] sm:$0xf]
    %v192 = vld [vmem:[#allocation5 + $0xfc] sm:$0xf]
    %v193 = vld [vmem:[#allocation5 + $0x100] sm:$0xf]
    %v194 = vld [vmem:[#allocation5 + $0x104] sm:$0xf]
    %v195 = vld [vmem:[#allocation5 + $0x108] sm:$0xf]
    %v196 = vld [vmem:[#allocation5 + $0x10c] sm:$0xf]
    %v197 = vld [vmem:[#allocation5 + $0x110] sm:$0xf]
    %v198 = vld [vmem:[#allocation5 + $0x114] sm:$0xf]
    %v199 = vld [vmem:[#allocation5 + $0x118] sm:$0xf]
    %v200 = vld [vmem:[#allocation5 + $0x11c] sm:$0xf]
    %v201 = vld [vmem:[#allocation5 + $0x120] sm:$0xf]
    %v202 = vld [vmem:[#allocation5 + $0x124] sm:$0xf]
    %v203 = vld [vmem:[#allocation5 + $0x128] sm:$0xf]
    %v204 = vld [vmem:[#allocation5 + $0x12c] sm:$0xf]
    %v205 = vld [vmem:[#allocation5 + $0x130] sm:$0xf]
    %v206 = vld [vmem:[#allocation5 + $0x134] sm:$0xf]
    %v207 = vld [vmem:[#allocation5 + $0x138] sm:$0xf]
    %v208 = vld [vmem:[#allocation5 + $0x13c] sm:$0xf]
    %v209 = vld [vmem:[#allocation5 + $0x140] sm:$0xf]
    %v210 = vld [vmem:[#allocation5 + $0x144] sm:$0xf]
    %v211 = vld [vmem:[#allocation5 + $0x148] sm:$0xf]
    %v212 = vld [vmem:[#allocation5 + $0x14c] sm:$0xf]
    %v213 = vld [vmem:[#allocation5 + $0x150] sm:$0xf]
    %v214 = vld [vmem:[#allocation5 + $0x154] sm:$0xf]
    %v215 = vld [vmem:[#allocation5 + $0x158] sm:$0xf]
    %v216 = vld [vmem:[#allocation5 + $0x15c] sm:$0xf]
    %v217 = vld [vmem:[#allocation5 + $0x160] sm:$0xf]
    %v218 = vld [vmem:[#allocation5 + $0x164] sm:$0xf]
    %v219 = vld [vmem:[#allocation5 + $0x168] sm:$0xf]
    %v220 = vld [vmem:[#allocation5 + $0x16c] sm:$0xf]
    %v221 = vld [vmem:[#allocation5 + $0x170] sm:$0xf]
    %v222 = vld [vmem:[#allocation5 + $0x174] sm:$0xf]
    %v223 = vld [vmem:[#allocation5 + $0x178] sm:$0xf]
    %v224 = vld [vmem:[#allocation5 + $0x17c] sm:$0xf]
    %v225 = vld [vmem:[#allocation5 + $0x180] sm:$0xf]
    %v226 = vld [vmem:[#allocation5 + $0x184] sm:$0xf]
    %v227 = vld [vmem:[#allocation5 + $0x188] sm:$0xf]
    %v228 = vld [vmem:[#allocation5 + $0x18c] sm:$0xf]
    %v229 = vld [vmem:[#allocation5 + $0x190] sm:$0xf]
    %v230 = vld [vmem:[#allocation5 + $0x194] sm:$0xf]
    %v231 = vld [vmem:[#allocation5 + $0x198] sm:$0xf]
    %v232 = vld [vmem:[#allocation5 + $0x19c] sm:$0xf]
    %v233 = vld [vmem:[#allocation5 + $0x1a0] sm:$0xf]
    %v234 = vld [vmem:[#allocation5 + $0x1a4] sm:$0xf]
    %v235 = vld [vmem:[#allocation5 + $0x1a8] sm:$0xf]
    %v236 = vld [vmem:[#allocation5 + $0x1ac] sm:$0xf]
    %v237 = vld [vmem:[#allocation5 + $0x1b0] sm:$0xf]
    %v238 = vld [vmem:[#allocation5 + $0x1b4] sm:$0xf]
    %v239 = vld [vmem:[#allocation5 + $0x1b8] sm:$0xf]
    %v240 = vld [vmem:[#allocation5 + $0x1bc] sm:$0xf]
    %v241 = vld [vmem:[#allocation5 + $0x1c0] sm:$0xf]
    %v242 = vld [vmem:[#allocation5 + $0x1c4] sm:$0xf]
    %v243 = vld [vmem:[#allocation5 + $0x1c8] sm:$0xf]
    %v244 = vld [vmem:[#allocation5 + $0x1cc] sm:$0xf]
    %v245 = vld [vmem:[#allocation5 + $0x1d0] sm:$0xf]
    %v246 = vld [vmem:[#allocation5 + $0x1d4] sm:$0xf]
    %v247 = vld [vmem:[#allocation5 + $0x1d8] sm:$0xf]
    %v248 = vld [vmem:[#allocation5 + $0x1dc] sm:$0xf]
    %v249 = vld [vmem:[#allocation5 + $0x1e0] sm:$0xf]
    %v250 = vld [vmem:[#allocation5 + $0x1e4] sm:$0xf]
    %v251 = vld [vmem:[#allocation5 + $0x1e8] sm:$0xf]
    %v252 = vld [vmem:[#allocation5 + $0x1ec] sm:$0xf]
    %v253 = vld [vmem:[#allocation5 + $0x1f0] sm:$0xf]
    %v254 = vld [vmem:[#allocation5 + $0x1f4] sm:$0xf]
    %v255 = vld [vmem:[#allocation5 + $0x1f8] sm:$0xf]
    %v256 = vld [vmem:[#allocation5 + $0x1fc] sm:$0xf]
    %v257 = vld [vmem:[%s4] sm:$0x1]
    %v258 = vlaneseq
    %v259 = vshrl.u32 %v258, 7
    %v260 = vsub.s32 0, %v259
    %v261 = vrot.slane %v257, %v260
    %v390 = vunpack.c.l.b16 %v129
    %v391 = vunpack.c.l.b16 %v130
    %v392 = vunpack.c.l.b16 %v131
    %v393 = vunpack.c.l.b16 %v132
    %v394 = vunpack.c.l.b16 %v133
    %v395 = vunpack.c.l.b16 %v134
    %v396 = vunpack.c.l.b16 %v135
    %v397 = vunpack.c.l.b16 %v136
    %v398 = vunpack.c.l.b16 %v137
    %v399 = vunpack.c.l.b16 %v138
    %v400 = vunpack.c.l.b16 %v139
    %v401 = vunpack.c.l.b16 %v140
    %v402 = vunpack.c.l.b16 %v141
    %v403 = vunpack.c.l.b16 %v142
    %v404 = vunpack.c.l.b16 %v143
    %v405 = vunpack.c.l.b16 %v144
    %v406 = vunpack.c.l.b16 %v145
    %v407 = vunpack.c.l.b16 %v146
    %v408 = vunpack.c.l.b16 %v147
    %v409 = vunpack.c.l.b16 %v148
    %v410 = vunpack.c.l.b16 %v149
    %v411 = vunpack.c.l.b16 %v150
    %v412 = vunpack.c.l.b16 %v151
    %v413 = vunpack.c.l.b16 %v152
    %v414 = vunpack.c.l.b16 %v153
    %v415 = vunpack.c.l.b16 %v154
    %v416 = vunpack.c.l.b16 %v155
    %v417 = vunpack.c.l.b16 %v156
    %v418 = vunpack.c.l.b16 %v157
    %v419 = vunpack.c.l.b16 %v158
    %v420 = vunpack.c.l.b16 %v159
    %v421 = vunpack.c.l.b16 %v160
    %v422 = vunpack.c.l.b16 %v161
    %v423 = vunpack.c.l.b16 %v162
    %v424 = vunpack.c.l.b16 %v163
    %v425 = vunpack.c.l.b16 %v164
    %v426 = vunpack.c.l.b16 %v165
    %v427 = vunpack.c.l.b16 %v166
    %v428 = vunpack.c.l.b16 %v167
    %v429 = vunpack.c.l.b16 %v168
    %v430 = vunpack.c.l.b16 %v169
    %v431 = vunpack.c.l.b16 %v170
    %v432 = vunpack.c.l.b16 %v171
    %v433 = vunpack.c.l.b16 %v172
    %v434 = vunpack.c.l.b16 %v173
    %v435 = vunpack.c.l.b16 %v174
    %v436 = vunpack.c.l.b16 %v175
    %v437 = vunpack.c.l.b16 %v176
    %v438 = vunpack.c.l.b16 %v177
    %v439 = vunpack.c.l.b16 %v178
    %v440 = vunpack.c.l.b16 %v179
    %v441 = vunpack.c.l.b16 %v180
    %v442 = vunpack.c.l.b16 %v181
    %v443 = vunpack.c.l.b16 %v182
    %v444 = vunpack.c.l.b16 %v183
    %v445 = vunpack.c.l.b16 %v184
    %v446 = vunpack.c.l.b16 %v185
    %v447 = vunpack.c.l.b16 %v186
    %v448 = vunpack.c.l.b16 %v187
    %v449 = vunpack.c.l.b16 %v188
    %v450 = vunpack.c.l.b16 %v189
    %v451 = vunpack.c.l.b16 %v190
    %v452 = vunpack.c.l.b16 %v191
    %v453 = vunpack.c.l.b16 %v192
    %v454 = vunpack.c.l.b16 %v193
    %v455 = vunpack.c.l.b16 %v194
    %v456 = vunpack.c.l.b16 %v195
    %v457 = vunpack.c.l.b16 %v196
    %v458 = vunpack.c.l.b16 %v197
    %v459 = vunpack.c.l.b16 %v198
    %v460 = vunpack.c.l.b16 %v199
    %v461 = vunpack.c.l.b16 %v200
    %v462 = vunpack.c.l.b16 %v201
    %v463 = vunpack.c.l.b16 %v202
    %v464 = vunpack.c.l.b16 %v203
    %v465 = vunpack.c.l.b16 %v204
    %v466 = vunpack.c.l.b16 %v205
    %v467 = vunpack.c.l.b16 %v206
    %v468 = vunpack.c.l.b16 %v207
    %v469 = vunpack.c.l.b16 %v208
    %v470 = vunpack.c.l.b16 %v209
    %v471 = vunpack.c.l.b16 %v210
    %v472 = vunpack.c.l.b16 %v211
    %v473 = vunpack.c.l.b16 %v212
    %v474 = vunpack.c.l.b16 %v213
    %v475 = vunpack.c.l.b16 %v214
    %v476 = vunpack.c.l.b16 %v215
    %v477 = vunpack.c.l.b16 %v216
    %v478 = vunpack.c.l.b16 %v217
    %v479 = vunpack.c.l.b16 %v218
    %v480 = vunpack.c.l.b16 %v219
    %v481 = vunpack.c.l.b16 %v220
    %v482 = vunpack.c.l.b16 %v221
    %v483 = vunpack.c.l.b16 %v222
    %v484 = vunpack.c.l.b16 %v223
    %v485 = vunpack.c.l.b16 %v224
    %v486 = vunpack.c.l.b16 %v225
    %v487 = vunpack.c.l.b16 %v226
    %v488 = vunpack.c.l.b16 %v227
    %v489 = vunpack.c.l.b16 %v228
    %v490 = vunpack.c.l.b16 %v229
    %v491 = vunpack.c.l.b16 %v230
    %v492 = vunpack.c.l.b16 %v231
    %v493 = vunpack.c.l.b16 %v232
    %v494 = vunpack.c.l.b16 %v233
    %v495 = vunpack.c.l.b16 %v234
    %v496 = vunpack.c.l.b16 %v235
    %v497 = vunpack.c.l.b16 %v236
    %v498 = vunpack.c.l.b16 %v237
    %v499 = vunpack.c.l.b16 %v238
    %v500 = vunpack.c.l.b16 %v239
    %v501 = vunpack.c.l.b16 %v240
    %v502 = vunpack.c.l.b16 %v241
    %v503 = vunpack.c.l.b16 %v242
    %v504 = vunpack.c.l.b16 %v243
    %v505 = vunpack.c.l.b16 %v244
    %v506 = vunpack.c.l.b16 %v245
    %v507 = vunpack.c.l.b16 %v246
    %v508 = vunpack.c.l.b16 %v247
    %v509 = vunpack.c.l.b16 %v248
    %v510 = vunpack.c.l.b16 %v249
    %v511 = vunpack.c.l.b16 %v250
    %v512 = vunpack.c.l.b16 %v251
    %v513 = vunpack.c.l.b16 %v252
    %v514 = vunpack.c.l.b16 %v253
    %v515 = vunpack.c.l.b16 %v254
    %v516 = vunpack.c.l.b16 %v255
    %v517 = vunpack.c.l.b16 %v256
    %v518 = vpack.c.b16 %v391, %v390
    %v519 = vpack.c.b16 %v393, %v392
    %v520 = vpack.c.b16 %v395, %v394
    %v521 = vpack.c.b16 %v397, %v396
    %v522 = vpack.c.b16 %v399, %v398
    %v523 = vpack.c.b16 %v401, %v400
    %v524 = vpack.c.b16 %v403, %v402
    %v525 = vpack.c.b16 %v405, %v404
    %v526 = vpack.c.b16 %v407, %v406
    %v527 = vpack.c.b16 %v409, %v408
    %v528 = vpack.c.b16 %v411, %v410
    %v529 = vpack.c.b16 %v413, %v412
    %v530 = vpack.c.b16 %v415, %v414
    %v531 = vpack.c.b16 %v417, %v416
    %v532 = vpack.c.b16 %v419, %v418
    %v533 = vpack.c.b16 %v421, %v420
    %v534 = vpack.c.b16 %v423, %v422
    %v535 = vpack.c.b16 %v425, %v424
    %v536 = vpack.c.b16 %v427, %v426
    %v537 = vpack.c.b16 %v429, %v428
    %v538 = vpack.c.b16 %v431, %v430
    %v539 = vpack.c.b16 %v433, %v432
    %v540 = vpack.c.b16 %v435, %v434
    %v541 = vpack.c.b16 %v437, %v436
    %v542 = vpack.c.b16 %v439, %v438
    %v543 = vpack.c.b16 %v441, %v440
    %v544 = vpack.c.b16 %v443, %v442
    %v545 = vpack.c.b16 %v445, %v444
    %v546 = vpack.c.b16 %v447, %v446
    %v547 = vpack.c.b16 %v449, %v448
    %v548 = vpack.c.b16 %v451, %v450
    %v549 = vpack.c.b16 %v453, %v452
    %v550 = vpack.c.b16 %v455, %v454
    %v551 = vpack.c.b16 %v457, %v456
    %v552 = vpack.c.b16 %v459, %v458
    %v553 = vpack.c.b16 %v461, %v460
    %v554 = vpack.c.b16 %v463, %v462
    %v555 = vpack.c.b16 %v465, %v464
    %v556 = vpack.c.b16 %v467, %v466
    %v557 = vpack.c.b16 %v469, %v468
    %v558 = vpack.c.b16 %v471, %v470
    %v559 = vpack.c.b16 %v473, %v472
    %v560 = vpack.c.b16 %v475, %v474
    %v561 = vpack.c.b16 %v477, %v476
    %v562 = vpack.c.b16 %v479, %v478
    %v563 = vpack.c.b16 %v481, %v480
    %v564 = vpack.c.b16 %v483, %v482
    %v565 = vpack.c.b16 %v485, %v484
    %v566 = vpack.c.b16 %v487, %v486
    %v567 = vpack.c.b16 %v489, %v488
    %v568 = vpack.c.b16 %v491, %v490
    %v569 = vpack.c.b16 %v493, %v492
    %v570 = vpack.c.b16 %v495, %v494
    %v571 = vpack.c.b16 %v497, %v496
    %v572 = vpack.c.b16 %v499, %v498
    %v573 = vpack.c.b16 %v501, %v500
    %v574 = vpack.c.b16 %v503, %v502
    %v575 = vpack.c.b16 %v505, %v504
    %v576 = vpack.c.b16 %v507, %v506
    %v577 = vpack.c.b16 %v509, %v508
    %v578 = vpack.c.b16 %v511, %v510
    %v579 = vpack.c.b16 %v513, %v512
    %v580 = vpack.c.b16 %v515, %v514
    %v581 = vpack.c.b16 %v517, %v516
    %646 = vmatprep.subr.bf16.mxu0 0
    %647 = vmatpush1.bf16.msra.mxu0 %v525
    %648 = vmatprep.subr.bf16.mxu0 0
    %649 = vmatpush1.bf16.msra.mxu0 %v524
    %650 = vmatprep.subr.bf16.mxu0 0
    %651 = vmatpush1.bf16.msra.mxu0 %v523
    %652 = vmatprep.subr.bf16.mxu0 0
    %653 = vmatpush1.bf16.msra.mxu0 %v522
    %654 = vmatprep.subr.bf16.mxu0 0
    %655 = vmatpush1.bf16.msra.mxu0 %v521
    %656 = vmatprep.subr.bf16.mxu0 0
    %657 = vmatpush1.bf16.msra.mxu0 %v520
    %658 = vmatprep.subr.bf16.mxu0 0
    %659 = vmatpush1.bf16.msra.mxu0 %v519
    %660 = vmatprep.subr.bf16.mxu0 0
    %661 = vmatpush1.bf16.msra.mxu0 %v518
    %662 = vmatprep.subr.bf16.mxu0 0
    %663 = vmatpush2.bf16.msra.mxu0 %v533
    %664 = vmatprep.subr.bf16.mxu0 0
    %665 = vmatpush2.bf16.msra.mxu0 %v532
    %666 = vmatprep.subr.bf16.mxu0 0
    %667 = vmatpush2.bf16.msra.mxu0 %v531
    %668 = vmatprep.subr.bf16.mxu0 0
    %669 = vmatpush2.bf16.msra.mxu0 %v530
    %670 = vmatprep.subr.bf16.mxu0 0
    %671 = vmatpush2.bf16.msra.mxu0 %v529
    %672 = vmatprep.subr.bf16.mxu0 0
    %673 = vmatpush2.bf16.msra.mxu0 %v528
    %674 = vmatprep.subr.bf16.mxu0 0
    %675 = vmatpush2.bf16.msra.mxu0 %v527
    %676 = vmatprep.subr.bf16.mxu0 0
    %677 = vmatpush2.bf16.msra.mxu0 %v526
    %678 = vmatprep.mubr.bf16.mxu0 %v122
    %679 = vmatmul.mubr.bf16.gmra.mxu0 %v121
    %v680 = vpop.f32.mrf.mxu0
    %v681 = vadd.f32 %v261, %v680
    %v682 = vpop.f32.mrf.mxu0
    %v683 = vpop.f32.mrf.mxu0
    %v684 = vpop.f32.mrf.mxu0
    %685 = vdwg.mxu0
    %686 = vmatprep.subr.bf16.mxu0 0
    %687 = vmatpush1.bf16.msra.mxu0 %v541
    %688 = vmatprep.subr.bf16.mxu0 0
    %689 = vmatpush1.bf16.msra.mxu0 %v540
    %690 = vmatprep.subr.bf16.mxu0 0
    %691 = vmatpush1.bf16.msra.mxu0 %v539
    %692 = vmatprep.subr.bf16.mxu0 0
    %693 = vmatpush1.bf16.msra.mxu0 %v538
    %694 = vmatprep.subr.bf16.mxu0 0
    %695 = vmatpush1.bf16.msra.mxu0 %v537
    %696 = vmatprep.subr.bf16.mxu0 0
    %697 = vmatpush1.bf16.msra.mxu0 %v536
    %698 = vmatprep.subr.bf16.mxu0 0
    %699 = vmatpush1.bf16.msra.mxu0 %v535
    %700 = vmatprep.subr.bf16.mxu0 0
    %701 = vmatpush1.bf16.msra.mxu0 %v534
    %702 = vmatprep.subr.bf16.mxu0 0
    %703 = vmatpush2.bf16.msra.mxu0 %v549
    %704 = vmatprep.subr.bf16.mxu0 0
    %705 = vmatpush2.bf16.msra.mxu0 %v548
    %706 = vmatprep.subr.bf16.mxu0 0
    %707 = vmatpush2.bf16.msra.mxu0 %v547
    %708 = vmatprep.subr.bf16.mxu0 0
    %709 = vmatpush2.bf16.msra.mxu0 %v546
    %710 = vmatprep.subr.bf16.mxu0 0
    %711 = vmatpush2.bf16.msra.mxu0 %v545
    %712 = vmatprep.subr.bf16.mxu0 0
    %713 = vmatpush2.bf16.msra.mxu0 %v544
    %714 = vmatprep.subr.bf16.mxu0 0
    %715 = vmatpush2.bf16.msra.mxu0 %v543
    %716 = vmatprep.subr.bf16.mxu0 0
    %717 = vmatpush2.bf16.msra.mxu0 %v542
    %718 = vmatprep.mubr.bf16.mxu0 %v124
    %719 = vmatmul.mubr.bf16.gmra.mxu0 %v123
    %v720 = vpop.f32.mrf.mxu0
    %v721 = vadd.f32 %v681, %v720
    %v722 = vpop.f32.mrf.mxu0
    %v723 = vpop.f32.mrf.mxu0
    %v724 = vpop.f32.mrf.mxu0
    %725 = vdwg.mxu0
    %726 = vmatprep.subr.bf16.mxu0 0
    %727 = vmatpush1.bf16.msra.mxu0 %v557
    %728 = vmatprep.subr.bf16.mxu0 0
    %729 = vmatpush1.bf16.msra.mxu0 %v556
    %730 = vmatprep.subr.bf16.mxu0 0
    %731 = vmatpush1.bf16.msra.mxu0 %v555
    %732 = vmatprep.subr.bf16.mxu0 0
    %733 = vmatpush1.bf16.msra.mxu0 %v554
    %734 = vmatprep.subr.bf16.mxu0 0
    %735 = vmatpush1.bf16.msra.mxu0 %v553
    %736 = vmatprep.subr.bf16.mxu0 0
    %737 = vmatpush1.bf16.msra.mxu0 %v552
    %738 = vmatprep.subr.bf16.mxu0 0
    %739 = vmatpush1.bf16.msra.mxu0 %v551
    %740 = vmatprep.subr.bf16.mxu0 0
    %741 = vmatpush1.bf16.msra.mxu0 %v550
    %742 = vmatprep.subr.bf16.mxu0 0
    %743 = vmatpush2.bf16.msra.mxu0 %v565
    %744 = vmatprep.subr.bf16.mxu0 0
    %745 = vmatpush2.bf16.msra.mxu0 %v564
    %746 = vmatprep.subr.bf16.mxu0 0
    %747 = vmatpush2.bf16.msra.mxu0 %v563
    %748 = vmatprep.subr.bf16.mxu0 0
    %749 = vmatpush2.bf16.msra.mxu0 %v562
    %750 = vmatprep.subr.bf16.mxu0 0
    %751 = vmatpush2.bf16.msra.mxu0 %v561
    %752 = vmatprep.subr.bf16.mxu0 0
    %753 = vmatpush2.bf16.msra.mxu0 %v560
    %754 = vmatprep.subr.bf16.mxu0 0
    %755 = vmatpush2.bf16.msra.mxu0 %v559
    %756 = vmatprep.subr.bf16.mxu0 0
    %757 = vmatpush2.bf16.msra.mxu0 %v558
    %758 = vmatprep.mubr.bf16.mxu0 %v126
    %759 = vmatmul.mubr.bf16.gmra.mxu0 %v125
    %v760 = vpop.f32.mrf.mxu0
    %v761 = vadd.f32 %v721, %v760
    %v762 = vpop.f32.mrf.mxu0
    %v763 = vpop.f32.mrf.mxu0
    %v764 = vpop.f32.mrf.mxu0
    %765 = vdwg.mxu0
    %766 = vmatprep.subr.bf16.mxu0 0
    %767 = vmatpush1.bf16.msra.mxu0 %v573
    %768 = vmatprep.subr.bf16.mxu0 0
    %769 = vmatpush1.bf16.msra.mxu0 %v572
    %770 = vmatprep.subr.bf16.mxu0 0
    %771 = vmatpush1.bf16.msra.mxu0 %v571
    %772 = vmatprep.subr.bf16.mxu0 0
    %773 = vmatpush1.bf16.msra.mxu0 %v570
    %774 = vmatprep.subr.bf16.mxu0 0
    %775 = vmatpush1.bf16.msra.mxu0 %v569
    %776 = vmatprep.subr.bf16.mxu0 0
    %777 = vmatpush1.bf16.msra.mxu0 %v568
    %778 = vmatprep.subr.bf16.mxu0 0
    %779 = vmatpush1.bf16.msra.mxu0 %v567
    %780 = vmatprep.subr.bf16.mxu0 0
    %781 = vmatpush1.bf16.msra.mxu0 %v566
    %782 = vmatprep.subr.bf16.mxu0 0
    %783 = vmatpush2.bf16.msra.mxu0 %v581
    %784 = vmatprep.subr.bf16.mxu0 0
    %785 = vmatpush2.bf16.msra.mxu0 %v580
    %786 = vmatprep.subr.bf16.mxu0 0
    %787 = vmatpush2.bf16.msra.mxu0 %v579
    %788 = vmatprep.subr.bf16.mxu0 0
    %789 = vmatpush2.bf16.msra.mxu0 %v578
    %790 = vmatprep.subr.bf16.mxu0 0
    %791 = vmatpush2.bf16.msra.mxu0 %v577
    %792 = vmatprep.subr.bf16.mxu0 0
    %793 = vmatpush2.bf16.msra.mxu0 %v576
    %794 = vmatprep.subr.bf16.mxu0 0
    %795 = vmatpush2.bf16.msra.mxu0 %v575
    %796 = vmatprep.subr.bf16.mxu0 0
    %797 = vmatpush2.bf16.msra.mxu0 %v574
    %798 = vmatprep.mubr.bf16.mxu0 %v128
    %799 = vmatmul.mubr.bf16.gmra.mxu0 %v127
    %v800 = vpop.f32.mrf.mxu0
    %v801 = vadd.f32 %v761, %v800
    %v802 = vpop.f32.mrf.mxu0
    %v803 = vpop.f32.mrf.mxu0
    %v804 = vpop.f32.mrf.mxu0
    %805 = vdwg.mxu0
    %v806 = vmax.f32 %v801, 0.0
    %v807 = vpack.c.bf16 %v806, %v806
    %v808 = vld [vmem:[#allocation7] sm:$0xf]
    %v809 = vld [vmem:[#allocation7 + $0x4] sm:$0xf]
    %v810 = vld [vmem:[#allocation7 + $0x8] sm:$0xf]
    %v811 = vld [vmem:[#allocation7 + $0xc] sm:$0xf]
    %v812 = vld [vmem:[#allocation7 + $0x10] sm:$0xf]
    %v813 = vld [vmem:[#allocation7 + $0x14] sm:$0xf]
    %v814 = vld [vmem:[#allocation7 + $0x18] sm:$0xf]
    %v815 = vld [vmem:[#allocation7 + $0x1c] sm:$0xf]
    %v816 = vld [vmem:[#allocation7 + $0x20] sm:$0xf]
    %v817 = vld [vmem:[#allocation7 + $0x24] sm:$0xf]
    %v818 = vld [vmem:[#allocation7 + $0x28] sm:$0xf]
    %v819 = vld [vmem:[#allocation7 + $0x2c] sm:$0xf]
    %v820 = vld [vmem:[#allocation7 + $0x30] sm:$0xf]
    %v821 = vld [vmem:[#allocation7 + $0x34] sm:$0xf]
    %v822 = vld [vmem:[#allocation7 + $0x38] sm:$0xf]
    %v823 = vld [vmem:[#allocation7 + $0x3c] sm:$0xf]
    %v824 = vld [vmem:[%s4 + $0x1] sm:$0x1]
    %v825 = vlaneseq
    %v826 = vshrl.u32 %v825, 7
    %v827 = vsub.s32 0, %v826
    %v828 = vrot.slane %v824, %v827
    %v845 = vunpack.c.l.b16 %v808
    %v846 = vunpack.c.l.b16 %v809
    %v847 = vunpack.c.l.b16 %v810
    %v848 = vunpack.c.l.b16 %v811
    %v849 = vunpack.c.l.b16 %v812
    %v850 = vunpack.c.l.b16 %v813
    %v851 = vunpack.c.l.b16 %v814
    %v852 = vunpack.c.l.b16 %v815
    %v853 = vunpack.c.l.b16 %v816
    %v854 = vunpack.c.l.b16 %v817
    %v855 = vunpack.c.l.b16 %v818
    %v856 = vunpack.c.l.b16 %v819
    %v857 = vunpack.c.l.b16 %v820
    %v858 = vunpack.c.l.b16 %v821
    %v859 = vunpack.c.l.b16 %v822
    %v860 = vunpack.c.l.b16 %v823
    %v861 = vpack.c.b16 %v846, %v845
    %v862 = vpack.c.b16 %v848, %v847
    %v863 = vpack.c.b16 %v850, %v849
    %v864 = vpack.c.b16 %v852, %v851
    %v865 = vpack.c.b16 %v854, %v853
    %v866 = vpack.c.b16 %v856, %v855
    %v867 = vpack.c.b16 %v858, %v857
    %v868 = vpack.c.b16 %v860, %v859
    %877 = vmatprep.subr.bf16.mxu0 0
    %878 = vmatpush1.bf16.msra.mxu0 %v868
    %879 = vmatprep.subr.bf16.mxu0 0
    %880 = vmatpush1.bf16.msra.mxu0 %v867
    %881 = vmatprep.subr.bf16.mxu0 0
    %882 = vmatpush1.bf16.msra.mxu0 %v866
    %883 = vmatprep.subr.bf16.mxu0 0
    %884 = vmatpush1.bf16.msra.mxu0 %v865
    %885 = vmatprep.subr.bf16.mxu0 0
    %886 = vmatpush1.bf16.msra.mxu0 %v864
    %887 = vmatprep.subr.bf16.mxu0 0
    %888 = vmatpush1.bf16.msra.mxu0 %v863
    %889 = vmatprep.subr.bf16.mxu0 0
    %890 = vmatpush1.bf16.msra.mxu0 %v862
    %891 = vmatprep.subr.bf16.mxu0 0
    %892 = vmatpush1.bf16.msra.mxu0 %v861
    %893 = vmatprep.subr.bf16.mxu0 0
    %894 = vmatpush2.bf16.msra.mxu0 0
    %895 = vmatprep.subr.bf16.mxu0 0
    %896 = vmatpush2.bf16.msra.mxu0 0
    %897 = vmatprep.subr.bf16.mxu0 0
    %898 = vmatpush2.bf16.msra.mxu0 0
    %899 = vmatprep.subr.bf16.mxu0 0
    %900 = vmatpush2.bf16.msra.mxu0 0
    %901 = vmatprep.subr.bf16.mxu0 0
    %902 = vmatpush2.bf16.msra.mxu0 0
    %903 = vmatprep.subr.bf16.mxu0 0
    %904 = vmatpush2.bf16.msra.mxu0 0
    %905 = vmatprep.subr.bf16.mxu0 0
    %906 = vmatpush2.bf16.msra.mxu0 0
    %907 = vmatprep.subr.bf16.mxu0 0
    %908 = vmatpush2.bf16.msra.mxu0 0
    %909 = vmatprep.mubr.bf16.mxu0 0
    %910 = vmatmul.mubr.bf16.gmra.mxu0 %v807
    %v911 = vpop.f32.mrf.mxu0
    %v912 = vadd.f32 %v828, %v911
    %v913 = vpop.f32.mrf.mxu0
    %v914 = vpop.f32.mrf.mxu0
    %v915 = vpop.f32.mrf.mxu0
    %916 = vdwg.mxu0
    %v917 = vmax.f32 %v912, 0.0
    %v918 = vpack.c.bf16 %v917, %v917
    %v919 = vld [vmem:[#allocation8] sm:$0xf]
    %v920 = vld [vmem:[#allocation8 + $0x4] sm:$0xf]
    %v921 = vld [vmem:[#allocation8 + $0x8] sm:$0xf]
    %v922 = vld [vmem:[#allocation8 + $0xc] sm:$0xf]
    %v923 = vld [vmem:[#allocation8 + $0x10] sm:$0xf]
    %v924 = vld [vmem:[#allocation8 + $0x14] sm:$0xf]
    %v925 = vld [vmem:[#allocation8 + $0x18] sm:$0xf]
    %v926 = vld [vmem:[#allocation8 + $0x1c] sm:$0xf]
    %v927 = vld [vmem:[#allocation8 + $0x20] sm:$0xf]
    %v928 = vld [vmem:[#allocation8 + $0x24] sm:$0xf]
    %v929 = vld [vmem:[#allocation8 + $0x28] sm:$0xf]
    %v930 = vld [vmem:[#allocation8 + $0x2c] sm:$0xf]
    %v931 = vld [vmem:[#allocation8 + $0x30] sm:$0xf]
    %v932 = vld [vmem:[#allocation8 + $0x34] sm:$0xf]
    %v933 = vld [vmem:[#allocation8 + $0x38] sm:$0xf]
    %v934 = vld [vmem:[#allocation8 + $0x3c] sm:$0xf]
    %v935 = vld [vmem:[%s4 + $0x2] sm:$0x1]
    %v936 = vlaneseq
    %v937 = vshrl.u32 %v936, 7
    %v938 = vsub.s32 0, %v937
    %v939 = vrot.slane %v935, %v938
    %v956 = vunpack.c.l.b16 %v919
    %v957 = vunpack.c.l.b16 %v920
    %v958 = vunpack.c.l.b16 %v921
    %v959 = vunpack.c.l.b16 %v922
    %v960 = vunpack.c.l.b16 %v923
    %v961 = vunpack.c.l.b16 %v924
    %v962 = vunpack.c.l.b16 %v925
    %v963 = vunpack.c.l.b16 %v926
    %v964 = vunpack.c.l.b16 %v927
    %v965 = vunpack.c.l.b16 %v928
    %v966 = vunpack.c.l.b16 %v929
    %v967 = vunpack.c.l.b16 %v930
    %v968 = vunpack.c.l.b16 %v931
    %v969 = vunpack.c.l.b16 %v932
    %v970 = vunpack.c.l.b16 %v933
    %v971 = vunpack.c.l.b16 %v934
    %v972 = vpack.c.b16 %v957, %v956
    %v973 = vpack.c.b16 %v959, %v958
    %v974 = vpack.c.b16 %v961, %v960
    %v975 = vpack.c.b16 %v963, %v962
    %v976 = vpack.c.b16 %v965, %v964
    %v977 = vpack.c.b16 %v967, %v966
    %v978 = vpack.c.b16 %v969, %v968
    %v979 = vpack.c.b16 %v971, %v970
    %988 = vmatprep.subr.bf16.mxu0 0
    %989 = vmatpush1.bf16.msra.mxu0 %v979
    %990 = vmatprep.subr.bf16.mxu0 0
    %991 = vmatpush1.bf16.msra.mxu0 %v978
    %992 = vmatprep.subr.bf16.mxu0 0
    %993 = vmatpush1.bf16.msra.mxu0 %v977
    %994 = vmatprep.subr.bf16.mxu0 0
    %995 = vmatpush1.bf16.msra.mxu0 %v976
    %996 = vmatprep.subr.bf16.mxu0 0
    %997 = vmatpush1.bf16.msra.mxu0 %v975
    %998 = vmatprep.subr.bf16.mxu0 0
    %999 = vmatpush1.bf16.msra.mxu0 %v974
    %1000 = vmatprep.subr.bf16.mxu0 0
    %1001 = vmatpush1.bf16.msra.mxu0 %v973
    %1002 = vmatprep.subr.bf16.mxu0 0
    %1003 = vmatpush1.bf16.msra.mxu0 %v972
    %1004 = vmatprep.subr.bf16.mxu0 0
    %1005 = vmatpush2.bf16.msra.mxu0 0
    %1006 = vmatprep.subr.bf16.mxu0 0
    %1007 = vmatpush2.bf16.msra.mxu0 0
    %1008 = vmatprep.subr.bf16.mxu0 0
    %1009 = vmatpush2.bf16.msra.mxu0 0
    %1010 = vmatprep.subr.bf16.mxu0 0
    %1011 = vmatpush2.bf16.msra.mxu0 0
    %1012 = vmatprep.subr.bf16.mxu0 0
    %1013 = vmatpush2.bf16.msra.mxu0 0
    %1014 = vmatprep.subr.bf16.mxu0 0
    %1015 = vmatpush2.bf16.msra.mxu0 0
    %1016 = vmatprep.subr.bf16.mxu0 0
    %1017 = vmatpush2.bf16.msra.mxu0 0
    %1018 = vmatprep.subr.bf16.mxu0 0
    %1019 = vmatpush2.bf16.msra.mxu0 0
    %1020 = vmatprep.mubr.bf16.mxu0 0
    %1021 = vmatmul.mubr.bf16.gmra.mxu0 %v918
    %v1022 = vpop.f32.mrf.mxu0
    %v1023 = vadd.f32 %v939, %v1022
    %v1024 = vpop.f32.mrf.mxu0
    %v1025 = vpop.f32.mrf.mxu0
    %v1026 = vpop.f32.mrf.mxu0
    %1027 = vdwg.mxu0
    %v1028 = vmax.f32 %v1023, 0.0
    %1029 = vst [vmem:[#allocation10] sm:$0x3] %v1028
    // Predicated region
    $region38: #{tpu_custom_call.1} parent=1 // pred_check
      _
    $region39: #{tpu_custom_call.1} parent=1 // pred_check_branch
      %1031 = sbr.rel (0) target = $region41
    $region40: #{tpu_custom_call.1} parent=1 // pred_region
      %s1033 = ssub.s32 32, 32
      %1034 = vsyncadd [#allocation4], %s1033
      %s1036 = sshll.u32 [#allocation10], 4
      %s1037 = int_to_ptr.vmem [resolvable:$true] %s1036
      %1039 = dma.vmem_to_hbm [thread:$0]  %s1037, 32, %s5, [#allocation4]
    $region41: #{tpu_custom_call.1} parent=1 // pred_fallthru
      _
    // Predicated region
    $region42: #{tpu_custom_call.1} parent=1 // pred_check
      _
    $region43: #{tpu_custom_call.1} parent=1 // pred_check_branch
      %1041 = sbr.rel (0) target = $region45
    $region44: #{tpu_custom_call.1} parent=1 // pred_region
      %1042 = dma.done [#allocation4], 32
    $region45: #{tpu_custom_call.1} parent=1 // pred_fallthru
      _
    %1043 = vsyncpa [#allocation3], 1
    %1044 = vsyncpa [#allocation6], 1
    %1045 = vsyncpa [#allocation9], 1
    %1046 = vsyncpa [#allocation4], 1

// kernel: tpu_custom_call.1
$region0: #{tpu_custom_call.1}
  #allocation0 [shape = 'u32[]', space=smem, size = 0x4, offset = 0x4, fixed_abs, tag = 'smem constant byte address 0x4 - core index']
  #allocation1 [shape = 'u32[144,128]{1,0:T(1,128)}', space=vmem, size = 0x12000, scoped, tag = 'internal scratch']
  %s0 = inlined_call_operand.hbm [shape: f32[2,1024], index: 0, kind: input, shape index: {}]
  %s1 = inlined_call_operand.hbm [shape: bf16[1024,128], index: 1, kind: input, shape index: {}]
  %s2 = inlined_call_operand.hbm [shape: bf16[128,128], index: 2, kind: input, shape index: {}]
  %s3 = inlined_call_operand.hbm [shape: bf16[128,128], index: 3, kind: input, shape index: {}]
  %s4 = inlined_call_operand.vmem [shape: f32[3,128], index: 4, kind: input, shape index: {}]
  %s5 = inlined_call_operand.hbm [shape: f32[2,128], index: 5, kind: output, shape index: {}]
  %s6 = sld [smem:[#allocation0]]
  $region46: #{tpu_custom_call.1} parent=0
    _
  %s8 = ssub.s32 1, %s6
  %s9 = scalar_select 0, %s8, %s6
  $region1: #{tpu_custom_call.1} parent=0
    #allocation2 [shape = 'u8[8192]{0}', space=vmem, size = 0x2000, scoped, tag = 'input window, operand 0, single buffered']
    #allocation3 [shape = 's32[1]{0}', space=sflag, size = 0x4, scoped, tag = 'scoped memory for tpu_custom_call.1']
    #allocation4 [shape = 's32[1]{0}', space=sflag, size = 0x4, scoped, tag = 'scoped memory for tpu_custom_call.1']
    #allocation5 [shape = 'u8[262144]{0}', space=vmem, size = 0x40000, scoped, tag = 'input window, operand 1, single buffered']
    #allocation6 [shape = 's32[1]{0}', space=sflag, size = 0x4, scoped, tag = 'scoped memory for tpu_custom_call.1']
    #allocation7 [shape = 'u8[32768]{0}', space=vmem, size = 0x8000, scoped, tag = 'input window, operand 2, single buffered']
    #allocation8 [shape = 'u8[32768]{0}', space=vmem, size = 0x8000, scoped, tag = 'input window, operand 3, single buffered']
    #allocation9 [shape = 's32[1]{0}', space=sflag, size = 0x4, scoped, tag = 'scoped memory for tpu_custom_call.1']
    #allocation10 [shape = 'u8[1024]{0}', space=vmem, size = 0x400, scoped, tag = 'output window, operand 0, single buffered']
    %10 = vsyncpa [#allocation3], 0
    %11 = vsyncpa [#allocation6], 0
    %12 = vsyncpa [#allocation9], 0
    %13 = vsyncpa [#allocation4], 0
    // Predicated region
    $region2: #{tpu_custom_call.1} parent=1 // pred_check
      _
    $region3: #{tpu_custom_call.1} parent=1 // pred_check_branch
      %15 = sbr.rel (0) target = $region5
    $region4: #{tpu_custom_call.1} parent=1 // pred_region
      %s17 = ssub.s32 256, 256
      %18 = vsyncadd [#allocation3], %s17
      %s20 = sshll.u32 [#allocation2], 4
      %s21 = int_to_ptr.vmem [resolvable:$true] %s20
      %23 = dma.hbm_to_vmem [thread:$0]  %s0, 256, %s21, [#allocation3]
    $region5: #{tpu_custom_call.1} parent=1 // pred_fallthru
      _
    // Predicated region
    $region6: #{tpu_custom_call.1} parent=1 // pred_check
      _
    $region7: #{tpu_custom_call.1} parent=1 // pred_check_branch
      %25 = sbr.rel (0) target = $region9
    $region8: #{tpu_custom_call.1} parent=1 // pred_region
      %s27 = ssub.s32 8192, 8192
      %28 = vsyncadd [#allocation6], %s27
      %s29 = sshll.u32 [#allocation5], 4
      %s30 = int_to_ptr.vmem [resolvable:$true] %s29
      %35 = dma.hbm_to_vmem [thread:$0]  %s1, 8192, %s30, [#allocation6], 64, 64, 4
    $region9: #{tpu_custom_call.1} parent=1 // pred_fallthru
      _
    // Predicated region
    $region10: #{tpu_custom_call.1} parent=1 // pred_check
      _
    $region11: #{tpu_custom_call.1} parent=1 // pred_check_branch
      %37 = sbr.rel (0) target = $region13
    $region12: #{tpu_custom_call.1} parent=1 // pred_region
      %s39 = ssub.s32 1024, 1024
      %40 = vsyncadd [#allocation6], %s39
      %s41 = sshll.u32 [#allocation7], 4
      %s42 = int_to_ptr.vmem [resolvable:$true] %s41
      %47 = dma.hbm_to_vmem [thread:$0]  %s2, 1024, %s42, [#allocation6], 64, 64, 4
    $region13: #{tpu_custom_call.1} parent=1 // pred_fallthru
      _
    // Predicated region
    $region14: #{tpu_custom_call.1} parent=1 // pred_check
      _
    $region15: #{tpu_custom_call.1} parent=1 // pred_check_branch
      %49 = sbr.rel (0) target = $region17
    $region16: #{tpu_custom_call.1} parent=1 // pred_region
      %s51 = ssub.s32 1024, 1024
      %52 = vsyncadd [#allocation9], %s51
      %s53 = sshll.u32 [#allocation8], 4
      %s54 = int_to_ptr.vmem [resolvable:$true] %s53
      %59 = dma.hbm_to_vmem [thread:$0]  %s3, 1024, %s54, [#allocation9], 64, 64, 4
    $region17: #{tpu_custom_call.1} parent=1 // pred_fallthru
      _
    // Predicated region
    $region18: #{tpu_custom_call.1} parent=1 // pred_check
      _
    $region19: #{tpu_custom_call.1} parent=1 // pred_check_branch
      %61 = sbr.rel (0) target = $region21
    $region20: #{tpu_custom_call.1} parent=1 // pred_region
      _
    $region21: #{tpu_custom_call.1} parent=1 // pred_fallthru
      _
    // Predicated region
    $region22: #{tpu_custom_call.1} parent=1 // pred_check
      _
    $region23: #{tpu_custom_call.1} parent=1 // pred_check_branch
      %63 = sbr.rel (0) target = $region25
    $region24: #{tpu_custom_call.1} parent=1 // pred_region
      %64 = dma.done [#allocation3], 256
    $region25: #{tpu_custom_call.1} parent=1 // pred_fallthru
      _
    // Predicated region
    $region26: #{tpu_custom_call.1} parent=1 // pred_check
      _
    $region27: #{tpu_custom_call.1} parent=1 // pred_check_branch
      %66 = sbr.rel (0) target = $region29
    $region28: #{tpu_custom_call.1} parent=1 // pred_region
      %67 = dma.done [#allocation6], 8192
    $region29: #{tpu_custom_call.1} parent=1 // pred_fallthru
      _
    // Predicated region
    $region30: #{tpu_custom_call.1} parent=1 // pred_check
      _
    $region31: #{tpu_custom_call.1} parent=1 // pred_check_branch
      %69 = sbr.rel (0) target = $region33
    $region32: #{tpu_custom_call.1} parent=1 // pred_region
      %70 = dma.done [#allocation6], 1024
    $region33: #{tpu_custom_call.1} parent=1 // pred_fallthru
      _
    // Predicated region
    $region34: #{tpu_custom_call.1} parent=1 // pred_check
      _
    $region35: #{tpu_custom_call.1} parent=1 // pred_check_branch
      %72 = sbr.rel (0) target = $region37
    $region36: #{tpu_custom_call.1} parent=1 // pred_region
      %73 = dma.done [#allocation9], 1024
    $region37: #{tpu_custom_call.1} parent=1 // pred_fallthru
      _
    %v75 = vld [vmem:[#allocation2] sm:$0xff]
    %v76 = vld [vmem:[#allocation2 + $0x8] sm:$0xff]
    %v79 = vcombine.high %v75, %v75
    %v81 = vunpack.c.l.s4 1983009808
    %v82 = vunpack.c.0.s8 %v81
    %v83 = vlaneseq
    %v84 = vshrl.u32 %v83, 7
    %v85 = vsub.s32 %v82, %v84
    %v86 = vrot.slane %v75, %v85
    %v88 = vunpack.c.l.s4 1983009808
    %v89 = vunpack.c.0.s8 %v88
    %v90 = vlaneseq
    %v91 = vshrl.u32 %v90, 7
    %v92 = vsub.s32 %v89, %v91
    %v93 = vrot.slane %v79, %v92
    %v94 = vcombine.high %v86, %v86
    %v95 = vcombine.high %v93, %v93
    %v96 = vcombine.high %v76, %v76
    %v98 = vunpack.c.l.s4 1983009808
    %v99 = vunpack.c.0.s8 %v98
    %v100 = vlaneseq
    %v101 = vshrl.u32 %v100, 7
    %v102 = vsub.s32 %v99, %v101
    %v103 = vrot.slane %v76, %v102
    %v105 = vunpack.c.l.s4 1983009808
    %v106 = vunpack.c.0.s8 %v105
    %v107 = vlaneseq
    %v108 = vshrl.u32 %v107, 7
    %v109 = vsub.s32 %v106, %v108
    %v110 = vrot.slane %v96, %v109
    %v111 = vcombine.high %v103, %v103
    %v112 = vcombine.high %v110, %v110
    %v121 = vpack.c.bf16 %v86, %v86
    %v122 = vpack.c.bf16 %v94, %v94
    %v123 = vpack.c.bf16 %v93, %v93
    %v124 = vpack.c.bf16 %v95, %v95
    %v125 = vpack.c.bf16 %v103, %v103
    %v126 = vpack.c.bf16 %v111, %v111
    %v127 = vpack.c.bf16 %v110, %v110
    %v128 = vpack.c.bf16 %v112, %v112
    %v129 = vld [vmem:[#allocation5] sm:$0xf]
    %v130 = vld [vmem:[#allocation5 + $0x4] sm:$0xf]
    %v131 = vld [vmem:[#allocation5 + $0x8] sm:$0xf]
    %v132 = vld [vmem:[#allocation5 + $0xc] sm:$0xf]
    %v133 = vld [vmem:[#allocation5 + $0x10] sm:$0xf]
    %v134 = vld [vmem:[#allocation5 + $0x14] sm:$0xf]
    %v135 = vld [vmem:[#allocation5 + $0x18] sm:$0xf]
    %v136 = vld [vmem:[#allocation5 + $0x1c] sm:$0xf]
    %v137 = vld [vmem:[#allocation5 + $0x20] sm:$0xf]
    %v138 = vld [vmem:[#allocation5 + $0x24] sm:$0xf]
    %v139 = vld [vmem:[#allocation5 + $0x28] sm:$0xf]
    %v140 = vld [vmem:[#allocation5 + $0x2c] sm:$0xf]
    %v141 = vld [vmem:[#allocation5 + $0x30] sm:$0xf]
    %v142 = vld [vmem:[#allocation5 + $0x34] sm:$0xf]
    %v143 = vld [vmem:[#allocation5 + $0x38] sm:$0xf]
    %v144 = vld [vmem:[#allocation5 + $0x3c] sm:$0xf]
    %v145 = vld [vmem:[#allocation5 + $0x40] sm:$0xf]
    %v146 = vld [vmem:[#allocation5 + $0x44] sm:$0xf]
    %v147 = vld [vmem:[#allocation5 + $0x48] sm:$0xf]
    %v148 = vld [vmem:[#allocation5 + $0x4c] sm:$0xf]
    %v149 = vld [vmem:[#allocation5 + $0x50] sm:$0xf]
    %v150 = vld [vmem:[#allocation5 + $0x54] sm:$0xf]
    %v151 = vld [vmem:[#allocation5 + $0x58] sm:$0xf]
    %v152 = vld [vmem:[#allocation5 + $0x5c] sm:$0xf]
    %v153 = vld [vmem:[#allocation5 + $0x60] sm:$0xf]
    %v154 = vld [vmem:[#allocation5 + $0x64] sm:$0xf]
    %v155 = vld [vmem:[#allocation5 + $0x68] sm:$0xf]
    %v156 = vld [vmem:[#allocation5 + $0x6c] sm:$0xf]
    %v157 = vld [vmem:[#allocation5 + $0x70] sm:$0xf]
    %v158 = vld [vmem:[#allocation5 + $0x74] sm:$0xf]
    %v159 = vld [vmem:[#allocation5 + $0x78] sm:$0xf]
    %v160 = vld [vmem:[#allocation5 + $0x7c] sm:$0xf]
    %v161 = vld [vmem:[#allocation5 + $0x80] sm:$0xf]
    %v162 = vld [vmem:[#allocation5 + $0x84] sm:$0xf]
    %v163 = vld [vmem:[#allocation5 + $0x88] sm:$0xf]
    %v164 = vld [vmem:[#allocation5 + $0x8c] sm:$0xf]
    %v165 = vld [vmem:[#allocation5 + $0x90] sm:$0xf]
    %v166 = vld [vmem:[#allocation5 + $0x94] sm:$0xf]
    %v167 = vld [vmem:[#allocation5 + $0x98] sm:$0xf]
    %v168 = vld [vmem:[#allocation5 + $0x9c] sm:$0xf]
    %v169 = vld [vmem:[#allocation5 + $0xa0] sm:$0xf]
    %v170 = vld [vmem:[#allocation5 + $0xa4] sm:$0xf]
    %v171 = vld [vmem:[#allocation5 + $0xa8] sm:$0xf]
    %v172 = vld [vmem:[#allocation5 + $0xac] sm:$0xf]
    %v173 = vld [vmem:[#allocation5 + $0xb0] sm:$0xf]
    %v174 = vld [vmem:[#allocation5 + $0xb4] sm:$0xf]
    %v175 = vld [vmem:[#allocation5 + $0xb8] sm:$0xf]
    %v176 = vld [vmem:[#allocation5 + $0xbc] sm:$0xf]
    %v177 = vld [vmem:[#allocation5 + $0xc0] sm:$0xf]
    %v178 = vld [vmem:[#allocation5 + $0xc4] sm:$0xf]
    %v179 = vld [vmem:[#allocation5 + $0xc8] sm:$0xf]
    %v180 = vld [vmem:[#allocation5 + $0xcc] sm:$0xf]
    %v181 = vld [vmem:[#allocation5 + $0xd0] sm:$0xf]
    %v182 = vld [vmem:[#allocation5 + $0xd4] sm:$0xf]
    %v183 = vld [vmem:[#allocation5 + $0xd8] sm:$0xf]
    %v184 = vld [vmem:[#allocation5 + $0xdc] sm:$0xf]
    %v185 = vld [vmem:[#allocation5 + $0xe0] sm:$0xf]
    %v186 = vld [vmem:[#allocation5 + $0xe4] sm:$0xf]
    %v187 = vld [vmem:[#allocation5 + $0xe8] sm:$0xf]
    %v188 = vld [vmem:[#allocation5 + $0xec] sm:$0xf]
    %v189 = vld [vmem:[#allocation5 + $0xf0] sm:$0xf]
    %v190 = vld [vmem:[#allocation5 + $0xf4] sm:$0xf]
    %v191 = vld [vmem:[#allocation5 + $0xf8] sm:$0xf]
    %v192 = vld [vmem:[#allocation5 + $0xfc] sm:$0xf]
    %v193 = vld [vmem:[#allocation5 + $0x100] sm:$0xf]
    %v194 = vld [vmem:[#allocation5 + $0x104] sm:$0xf]
    %v195 = vld [vmem:[#allocation5 + $0x108] sm:$0xf]
    %v196 = vld [vmem:[#allocation5 + $0x10c] sm:$0xf]
    %v197 = vld [vmem:[#allocation5 + $0x110] sm:$0xf]
    %v198 = vld [vmem:[#allocation5 + $0x114] sm:$0xf]
    %v199 = vld [vmem:[#allocation5 + $0x118] sm:$0xf]
    %v200 = vld [vmem:[#allocation5 + $0x11c] sm:$0xf]
    %v201 = vld [vmem:[#allocation5 + $0x120] sm:$0xf]
    %v202 = vld [vmem:[#allocation5 + $0x124] sm:$0xf]
    %v203 = vld [vmem:[#allocation5 + $0x128] sm:$0xf]
    %v204 = vld [vmem:[#allocation5 + $0x12c] sm:$0xf]
    %v205 = vld [vmem:[#allocation5 + $0x130] sm:$0xf]
    %v206 = vld [vmem:[#allocation5 + $0x134] sm:$0xf]
    %v207 = vld [vmem:[#allocation5 + $0x138] sm:$0xf]
    %v208 = vld [vmem:[#allocation5 + $0x13c] sm:$0xf]
    %v209 = vld [vmem:[#allocation5 + $0x140] sm:$0xf]
    %v210 = vld [vmem:[#allocation5 + $0x144] sm:$0xf]
    %v211 = vld [vmem:[#allocation5 + $0x148] sm:$0xf]
    %v212 = vld [vmem:[#allocation5 + $0x14c] sm:$0xf]
    %v213 = vld [vmem:[#allocation5 + $0x150] sm:$0xf]
    %v214 = vld [vmem:[#allocation5 + $0x154] sm:$0xf]
    %v215 = vld [vmem:[#allocation5 + $0x158] sm:$0xf]
    %v216 = vld [vmem:[#allocation5 + $0x15c] sm:$0xf]
    %v217 = vld [vmem:[#allocation5 + $0x160] sm:$0xf]
    %v218 = vld [vmem:[#allocation5 + $0x164] sm:$0xf]
    %v219 = vld [vmem:[#allocation5 + $0x168] sm:$0xf]
    %v220 = vld [vmem:[#allocation5 + $0x16c] sm:$0xf]
    %v221 = vld [vmem:[#allocation5 + $0x170] sm:$0xf]
    %v222 = vld [vmem:[#allocation5 + $0x174] sm:$0xf]
    %v223 = vld [vmem:[#allocation5 + $0x178] sm:$0xf]
    %v224 = vld [vmem:[#allocation5 + $0x17c] sm:$0xf]
    %v225 = vld [vmem:[#allocation5 + $0x180] sm:$0xf]
    %v226 = vld [vmem:[#allocation5 + $0x184] sm:$0xf]
    %v227 = vld [vmem:[#allocation5 + $0x188] sm:$0xf]
    %v228 = vld [vmem:[#allocation5 + $0x18c] sm:$0xf]
    %v229 = vld [vmem:[#allocation5 + $0x190] sm:$0xf]
    %v230 = vld [vmem:[#allocation5 + $0x194] sm:$0xf]
    %v231 = vld [vmem:[#allocation5 + $0x198] sm:$0xf]
    %v232 = vld [vmem:[#allocation5 + $0x19c] sm:$0xf]
    %v233 = vld [vmem:[#allocation5 + $0x1a0] sm:$0xf]
    %v234 = vld [vmem:[#allocation5 + $0x1a4] sm:$0xf]
    %v235 = vld [vmem:[#allocation5 + $0x1a8] sm:$0xf]
    %v236 = vld [vmem:[#allocation5 + $0x1ac] sm:$0xf]
    %v237 = vld [vmem:[#allocation5 + $0x1b0] sm:$0xf]
    %v238 = vld [vmem:[#allocation5 + $0x1b4] sm:$0xf]
    %v239 = vld [vmem:[#allocation5 + $0x1b8] sm:$0xf]
    %v240 = vld [vmem:[#allocation5 + $0x1bc] sm:$0xf]
    %v241 = vld [vmem:[#allocation5 + $0x1c0] sm:$0xf]
    %v242 = vld [vmem:[#allocation5 + $0x1c4] sm:$0xf]
    %v243 = vld [vmem:[#allocation5 + $0x1c8] sm:$0xf]
    %v244 = vld [vmem:[#allocation5 + $0x1cc] sm:$0xf]
    %v245 = vld [vmem:[#allocation5 + $0x1d0] sm:$0xf]
    %v246 = vld [vmem:[#allocation5 + $0x1d4] sm:$0xf]
    %v247 = vld [vmem:[#allocation5 + $0x1d8] sm:$0xf]
    %v248 = vld [vmem:[#allocation5 + $0x1dc] sm:$0xf]
    %v249 = vld [vmem:[#allocation5 + $0x1e0] sm:$0xf]
    %v250 = vld [vmem:[#allocation5 + $0x1e4] sm:$0xf]
    %v251 = vld [vmem:[#allocation5 + $0x1e8] sm:$0xf]
    %v252 = vld [vmem:[#allocation5 + $0x1ec] sm:$0xf]
    %v253 = vld [vmem:[#allocation5 + $0x1f0] sm:$0xf]
    %v254 = vld [vmem:[#allocation5 + $0x1f4] sm:$0xf]
    %v255 = vld [vmem:[#allocation5 + $0x1f8] sm:$0xf]
    %v256 = vld [vmem:[#allocation5 + $0x1fc] sm:$0xf]
    %v257 = vld [vmem:[%s4] sm:$0x1]
    %v258 = vlaneseq
    %v259 = vshrl.u32 %v258, 7
    %v260 = vsub.s32 0, %v259
    %v261 = vrot.slane %v257, %v260
    %v390 = vunpack.c.l.b16 %v129
    %v391 = vunpack.c.l.b16 %v130
    %v392 = vunpack.c.l.b16 %v131
    %v393 = vunpack.c.l.b16 %v132
    %v394 = vunpack.c.l.b16 %v133
    %v395 = vunpack.c.l.b16 %v134
    %v396 = vunpack.c.l.b16 %v135
    %v397 = vunpack.c.l.b16 %v136
    %v398 = vunpack.c.l.b16 %v137
    %v399 = vunpack.c.l.b16 %v138
    %v400 = vunpack.c.l.b16 %v139
    %v401 = vunpack.c.l.b16 %v140
    %v402 = vunpack.c.l.b16 %v141
    %v403 = vunpack.c.l.b16 %v142
    %v404 = vunpack.c.l.b16 %v143
    %v405 = vunpack.c.l.b16 %v144
    %v406 = vunpack.c.l.b16 %v145
    %v407 = vunpack.c.l.b16 %v146
    %v408 = vunpack.c.l.b16 %v147
    %v409 = vunpack.c.l.b16 %v148
    %v410 = vunpack.c.l.b16 %v149
    %v411 = vunpack.c.l.b16 %v150
    %v412 = vunpack.c.l.b16 %v151
    %v413 = vunpack.c.l.b16 %v152
    %v414 = vunpack.c.l.b16 %v153
    %v415 = vunpack.c.l.b16 %v154
    %v416 = vunpack.c.l.b16 %v155
    %v417 = vunpack.c.l.b16 %v156
    %v418 = vunpack.c.l.b16 %v157
    %v419 = vunpack.c.l.b16 %v158
    %v420 = vunpack.c.l.b16 %v159
    %v421 = vunpack.c.l.b16 %v160
    %v422 = vunpack.c.l.b16 %v161
    %v423 = vunpack.c.l.b16 %v162
    %v424 = vunpack.c.l.b16 %v163
    %v425 = vunpack.c.l.b16 %v164
    %v426 = vunpack.c.l.b16 %v165
    %v427 = vunpack.c.l.b16 %v166
    %v428 = vunpack.c.l.b16 %v167
    %v429 = vunpack.c.l.b16 %v168
    %v430 = vunpack.c.l.b16 %v169
    %v431 = vunpack.c.l.b16 %v170
    %v432 = vunpack.c.l.b16 %v171
    %v433 = vunpack.c.l.b16 %v172
    %v434 = vunpack.c.l.b16 %v173
    %v435 = vunpack.c.l.b16 %v174
    %v436 = vunpack.c.l.b16 %v175
    %v437 = vunpack.c.l.b16 %v176
    %v438 = vunpack.c.l.b16 %v177
    %v439 = vunpack.c.l.b16 %v178
    %v440 = vunpack.c.l.b16 %v179
    %v441 = vunpack.c.l.b16 %v180
    %v442 = vunpack.c.l.b16 %v181
    %v443 = vunpack.c.l.b16 %v182
    %v444 = vunpack.c.l.b16 %v183
    %v445 = vunpack.c.l.b16 %v184
    %v446 = vunpack.c.l.b16 %v185
    %v447 = vunpack.c.l.b16 %v186
    %v448 = vunpack.c.l.b16 %v187
    %v449 = vunpack.c.l.b16 %v188
    %v450 = vunpack.c.l.b16 %v189
    %v451 = vunpack.c.l.b16 %v190
    %v452 = vunpack.c.l.b16 %v191
    %v453 = vunpack.c.l.b16 %v192
    %v454 = vunpack.c.l.b16 %v193
    %v455 = vunpack.c.l.b16 %v194
    %v456 = vunpack.c.l.b16 %v195
    %v457 = vunpack.c.l.b16 %v196
    %v458 = vunpack.c.l.b16 %v197
    %v459 = vunpack.c.l.b16 %v198
    %v460 = vunpack.c.l.b16 %v199
    %v461 = vunpack.c.l.b16 %v200
    %v462 = vunpack.c.l.b16 %v201
    %v463 = vunpack.c.l.b16 %v202
    %v464 = vunpack.c.l.b16 %v203
    %v465 = vunpack.c.l.b16 %v204
    %v466 = vunpack.c.l.b16 %v205
    %v467 = vunpack.c.l.b16 %v206
    %v468 = vunpack.c.l.b16 %v207
    %v469 = vunpack.c.l.b16 %v208
    %v470 = vunpack.c.l.b16 %v209
    %v471 = vunpack.c.l.b16 %v210
    %v472 = vunpack.c.l.b16 %v211
    %v473 = vunpack.c.l.b16 %v212
    %v474 = vunpack.c.l.b16 %v213
    %v475 = vunpack.c.l.b16 %v214
    %v476 = vunpack.c.l.b16 %v215
    %v477 = vunpack.c.l.b16 %v216
    %v478 = vunpack.c.l.b16 %v217
    %v479 = vunpack.c.l.b16 %v218
    %v480 = vunpack.c.l.b16 %v219
    %v481 = vunpack.c.l.b16 %v220
    %v482 = vunpack.c.l.b16 %v221
    %v483 = vunpack.c.l.b16 %v222
    %v484 = vunpack.c.l.b16 %v223
    %v485 = vunpack.c.l.b16 %v224
    %v486 = vunpack.c.l.b16 %v225
    %v487 = vunpack.c.l.b16 %v226
    %v488 = vunpack.c.l.b16 %v227
    %v489 = vunpack.c.l.b16 %v228
    %v490 = vunpack.c.l.b16 %v229
    %v491 = vunpack.c.l.b16 %v230
    %v492 = vunpack.c.l.b16 %v231
    %v493 = vunpack.c.l.b16 %v232
    %v494 = vunpack.c.l.b16 %v233
    %v495 = vunpack.c.l.b16 %v234
    %v496 = vunpack.c.l.b16 %v235
    %v497 = vunpack.c.l.b16 %v236
    %v498 = vunpack.c.l.b16 %v237
    %v499 = vunpack.c.l.b16 %v238
    %v500 = vunpack.c.l.b16 %v239
    %v501 = vunpack.c.l.b16 %v240
    %v502 = vunpack.c.l.b16 %v241
    %v503 = vunpack.c.l.b16 %v242
    %v504 = vunpack.c.l.b16 %v243
    %v505 = vunpack.c.l.b16 %v244
    %v506 = vunpack.c.l.b16 %v245
    %v507 = vunpack.c.l.b16 %v246
    %v508 = vunpack.c.l.b16 %v247
    %v509 = vunpack.c.l.b16 %v248
    %v510 = vunpack.c.l.b16 %v249
    %v511 = vunpack.c.l.b16 %v250
    %v512 = vunpack.c.l.b16 %v251
    %v513 = vunpack.c.l.b16 %v252
    %v514 = vunpack.c.l.b16 %v253
    %v515 = vunpack.c.l.b16 %v254
    %v516 = vunpack.c.l.b16 %v255
    %v517 = vunpack.c.l.b16 %v256
    %v518 = vpack.c.b16 %v391, %v390
    %v519 = vpack.c.b16 %v393, %v392
    %v520 = vpack.c.b16 %v395, %v394
    %v521 = vpack.c.b16 %v397, %v396
    %v522 = vpack.c.b16 %v399, %v398
    %v523 = vpack.c.b16 %v401, %v400
    %v524 = vpack.c.b16 %v403, %v402
    %v525 = vpack.c.b16 %v405, %v404
    %v526 = vpack.c.b16 %v407, %v406
    %v527 = vpack.c.b16 %v409, %v408
    %v528 = vpack.c.b16 %v411, %v410
    %v529 = vpack.c.b16 %v413, %v412
    %v530 = vpack.c.b16 %v415, %v414
    %v531 = vpack.c.b16 %v417, %v416
    %v532 = vpack.c.b16 %v419, %v418
    %v533 = vpack.c.b16 %v421, %v420
    %v534 = vpack.c.b16 %v423, %v422
    %v535 = vpack.c.b16 %v425, %v424
    %v536 = vpack.c.b16 %v427, %v426
    %v537 = vpack.c.b16 %v429, %v428
    %v538 = vpack.c.b16 %v431, %v430
    %v539 = vpack.c.b16 %v433, %v432
    %v540 = vpack.c.b16 %v435, %v434
    %v541 = vpack.c.b16 %v437, %v436
    %v542 = vpack.c.b16 %v439, %v438
    %v543 = vpack.c.b16 %v441, %v440
    %v544 = vpack.c.b16 %v443, %v442
    %v545 = vpack.c.b16 %v445, %v444
    %v546 = vpack.c.b16 %v447, %v446
    %v547 = vpack.c.b16 %v449, %v448
    %v548 = vpack.c.b16 %v451, %v450
    %v549 = vpack.c.b16 %v453, %v452
    %v550 = vpack.c.b16 %v455, %v454
    %v551 = vpack.c.b16 %v457, %v456
    %v552 = vpack.c.b16 %v459, %v458
    %v553 = vpack.c.b16 %v461, %v460
    %v554 = vpack.c.b16 %v463, %v462
    %v555 = vpack.c.b16 %v465, %v464
    %v556 = vpack.c.b16 %v467, %v466
    %v557 = vpack.c.b16 %v469, %v468
    %v558 = vpack.c.b16 %v471, %v470
    %v559 = vpack.c.b16 %v473, %v472
    %v560 = vpack.c.b16 %v475, %v474
    %v561 = vpack.c.b16 %v477, %v476
    %v562 = vpack.c.b16 %v479, %v478
    %v563 = vpack.c.b16 %v481, %v480
    %v564 = vpack.c.b16 %v483, %v482
    %v565 = vpack.c.b16 %v485, %v484
    %v566 = vpack.c.b16 %v487, %v486
    %v567 = vpack.c.b16 %v489, %v488
    %v568 = vpack.c.b16 %v491, %v490
    %v569 = vpack.c.b16 %v493, %v492
    %v570 = vpack.c.b16 %v495, %v494
    %v571 = vpack.c.b16 %v497, %v496
    %v572 = vpack.c.b16 %v499, %v498
    %v573 = vpack.c.b16 %v501, %v500
    %v574 = vpack.c.b16 %v503, %v502
    %v575 = vpack.c.b16 %v505, %v504
    %v576 = vpack.c.b16 %v507, %v506
    %v577 = vpack.c.b16 %v509, %v508
    %v578 = vpack.c.b16 %v511, %v510
    %v579 = vpack.c.b16 %v513, %v512
    %v580 = vpack.c.b16 %v515, %v514
    %v581 = vpack.c.b16 %v517, %v516
    %646 = vmatprep.subr.bf16.mxu0 0
    %647 = vmatpush1.bf16.msra.mxu0 %v525
    %648 = vmatprep.subr.bf16.mxu0 0
    %649 = vmatpush1.bf16.msra.mxu0 %v524
    %650 = vmatprep.subr.bf16.mxu0 0
    %651 = vmatpush1.bf16.msra.mxu0 %v523
    %652 = vmatprep.subr.bf16.mxu0 0
    %653 = vmatpush1.bf16.msra.mxu0 %v522
    %654 = vmatprep.subr.bf16.mxu0 0
    %655 = vmatpush1.bf16.msra.mxu0 %v521
    %656 = vmatprep.subr.bf16.mxu0 0
    %657 = vmatpush1.bf16.msra.mxu0 %v520
    %658 = vmatprep.subr.bf16.mxu0 0
    %659 = vmatpush1.bf16.msra.mxu0 %v519
    %660 = vmatprep.subr.bf16.mxu0 0
    %661 = vmatpush1.bf16.msra.mxu0 %v518
    %662 = vmatprep.subr.bf16.mxu0 0
    %663 = vmatpush2.bf16.msra.mxu0 %v533
    %664 = vmatprep.subr.bf16.mxu0 0
    %665 = vmatpush2.bf16.msra.mxu0 %v532
    %666 = vmatprep.subr.bf16.mxu0 0
    %667 = vmatpush2.bf16.msra.mxu0 %v531
    %668 = vmatprep.subr.bf16.mxu0 0
    %669 = vmatpush2.bf16.msra.mxu0 %v530
    %670 = vmatprep.subr.bf16.mxu0 0
    %671 = vmatpush2.bf16.msra.mxu0 %v529
    %672 = vmatprep.subr.bf16.mxu0 0
    %673 = vmatpush2.bf16.msra.mxu0 %v528
    %674 = vmatprep.subr.bf16.mxu0 0
    %675 = vmatpush2.bf16.msra.mxu0 %v527
    %676 = vmatprep.subr.bf16.mxu0 0
    %677 = vmatpush2.bf16.msra.mxu0 %v526
    %678 = vmatprep.mubr.bf16.mxu0 %v122
    %679 = vmatmul.mubr.bf16.gmra.mxu0 %v121
    %v680 = vpop.f32.mrf.mxu0
    %v681 = vadd.f32 %v261, %v680
    %v682 = vpop.f32.mrf.mxu0
    %v683 = vpop.f32.mrf.mxu0
    %v684 = vpop.f32.mrf.mxu0
    %685 = vdwg.mxu0
    %686 = vmatprep.subr.bf16.mxu0 0
    %687 = vmatpush1.bf16.msra.mxu0 %v541
    %688 = vmatprep.subr.bf16.mxu0 0
    %689 = vmatpush1.bf16.msra.mxu0 %v540
    %690 = vmatprep.subr.bf16.mxu0 0
    %691 = vmatpush1.bf16.msra.mxu0 %v539
    %692 = vmatprep.subr.bf16.mxu0 0
    %693 = vmatpush1.bf16.msra.mxu0 %v538
    %694 = vmatprep.subr.bf16.mxu0 0
    %695 = vmatpush1.bf16.msra.mxu0 %v537
    %696 = vmatprep.subr.bf16.mxu0 0
    %697 = vmatpush1.bf16.msra.mxu0 %v536
    %698 = vmatprep.subr.bf16.mxu0 0
    %699 = vmatpush1.bf16.msra.mxu0 %v535
    %700 = vmatprep.subr.bf16.mxu0 0
    %701 = vmatpush1.bf16.msra.mxu0 %v534
    %702 = vmatprep.subr.bf16.mxu0 0
    %703 = vmatpush2.bf16.msra.mxu0 %v549
    %704 = vmatprep.subr.bf16.mxu0 0
    %705 = vmatpush2.bf16.msra.mxu0 %v548
    %706 = vmatprep.subr.bf16.mxu0 0
    %707 = vmatpush2.bf16.msra.mxu0 %v547
    %708 = vmatprep.subr.bf16.mxu0 0
    %709 = vmatpush2.bf16.msra.mxu0 %v546
    %710 = vmatprep.subr.bf16.mxu0 0
    %711 = vmatpush2.bf16.msra.mxu0 %v545
    %712 = vmatprep.subr.bf16.mxu0 0
    %713 = vmatpush2.bf16.msra.mxu0 %v544
    %714 = vmatprep.subr.bf16.mxu0 0
    %715 = vmatpush2.bf16.msra.mxu0 %v543
    %716 = vmatprep.subr.bf16.mxu0 0
    %717 = vmatpush2.bf16.msra.mxu0 %v542
    %718 = vmatprep.mubr.bf16.mxu0 %v124
    %719 = vmatmul.mubr.bf16.gmra.mxu0 %v123
    %v720 = vpop.f32.mrf.mxu0
    %v721 = vadd.f32 %v681, %v720
    %v722 = vpop.f32.mrf.mxu0
    %v723 = vpop.f32.mrf.mxu0
    %v724 = vpop.f32.mrf.mxu0
    %725 = vdwg.mxu0
    %726 = vmatprep.subr.bf16.mxu0 0
    %727 = vmatpush1.bf16.msra.mxu0 %v557
    %728 = vmatprep.subr.bf16.mxu0 0
    %729 = vmatpush1.bf16.msra.mxu0 %v556
    %730 = vmatprep.subr.bf16.mxu0 0
    %731 = vmatpush1.bf16.msra.mxu0 %v555
    %732 = vmatprep.subr.bf16.mxu0 0
    %733 = vmatpush1.bf16.msra.mxu0 %v554
    %734 = vmatprep.subr.bf16.mxu0 0
    %735 = vmatpush1.bf16.msra.mxu0 %v553
    %736 = vmatprep.subr.bf16.mxu0 0
    %737 = vmatpush1.bf16.msra.mxu0 %v552
    %738 = vmatprep.subr.bf16.mxu0 0
    %739 = vmatpush1.bf16.msra.mxu0 %v551
    %740 = vmatprep.subr.bf16.mxu0 0
    %741 = vmatpush1.bf16.msra.mxu0 %v550
    %742 = vmatprep.subr.bf16.mxu0 0
    %743 = vmatpush2.bf16.msra.mxu0 %v565
    %744 = vmatprep.subr.bf16.mxu0 0
    %745 = vmatpush2.bf16.msra.mxu0 %v564
    %746 = vmatprep.subr.bf16.mxu0 0
    %747 = vmatpush2.bf16.msra.mxu0 %v563
    %748 = vmatprep.subr.bf16.mxu0 0
    %749 = vmatpush2.bf16.msra.mxu0 %v562
    %750 = vmatprep.subr.bf16.mxu0 0
    %751 = vmatpush2.bf16.msra.mxu0 %v561
    %752 = vmatprep.subr.bf16.mxu0 0
    %753 = vmatpush2.bf16.msra.mxu0 %v560
    %754 = vmatprep.subr.bf16.mxu0 0
    %755 = vmatpush2.bf16.msra.mxu0 %v559
    %756 = vmatprep.subr.bf16.mxu0 0
    %757 = vmatpush2.bf16.msra.mxu0 %v558
    %758 = vmatprep.mubr.bf16.mxu0 %v126
    %759 = vmatmul.mubr.bf16.gmra.mxu0 %v125
    %v760 = vpop.f32.mrf.mxu0
    %v761 = vadd.f32 %v721, %v760
    %v762 = vpop.f32.mrf.mxu0
    %v763 = vpop.f32.mrf.mxu0
    %v764 = vpop.f32.mrf.mxu0
    %765 = vdwg.mxu0
    %766 = vmatprep.subr.bf16.mxu0 0
    %767 = vmatpush1.bf16.msra.mxu0 %v573
    %768 = vmatprep.subr.bf16.mxu0 0
    %769 = vmatpush1.bf16.msra.mxu0 %v572
    %770 = vmatprep.subr.bf16.mxu0 0
    %771 = vmatpush1.bf16.msra.mxu0 %v571
    %772 = vmatprep.subr.bf16.mxu0 0
    %773 = vmatpush1.bf16.msra.mxu0 %v570
    %774 = vmatprep.subr.bf16.mxu0 0
    %775 = vmatpush1.bf16.msra.mxu0 %v569
    %776 = vmatprep.subr.bf16.mxu0 0
    %777 = vmatpush1.bf16.msra.mxu0 %v568
    %778 = vmatprep.subr.bf16.mxu0 0
    %779 = vmatpush1.bf16.msra.mxu0 %v567
    %780 = vmatprep.subr.bf16.mxu0 0
    %781 = vmatpush1.bf16.msra.mxu0 %v566
    %782 = vmatprep.subr.bf16.mxu0 0
    %783 = vmatpush2.bf16.msra.mxu0 %v581
    %784 = vmatprep.subr.bf16.mxu0 0
    %785 = vmatpush2.bf16.msra.mxu0 %v580
    %786 = vmatprep.subr.bf16.mxu0 0
    %787 = vmatpush2.bf16.msra.mxu0 %v579
    %788 = vmatprep.subr.bf16.mxu0 0
    %789 = vmatpush2.bf16.msra.mxu0 %v578
    %790 = vmatprep.subr.bf16.mxu0 0
    %791 = vmatpush2.bf16.msra.mxu0 %v577
    %792 = vmatprep.subr.bf16.mxu0 0
    %793 = vmatpush2.bf16.msra.mxu0 %v576
    %794 = vmatprep.subr.bf16.mxu0 0
    %795 = vmatpush2.bf16.msra.mxu0 %v575
    %796 = vmatprep.subr.bf16.mxu0 0
    %797 = vmatpush2.bf16.msra.mxu0 %v574
    %798 = vmatprep.mubr.bf16.mxu0 %v128
    %799 = vmatmul.mubr.bf16.gmra.mxu0 %v127
    %v800 = vpop.f32.mrf.mxu0
    %v801 = vadd.f32 %v761, %v800
    %v802 = vpop.f32.mrf.mxu0
    %v803 = vpop.f32.mrf.mxu0
    %v804 = vpop.f32.mrf.mxu0
    %805 = vdwg.mxu0
    %v806 = vmax.f32 %v801, 0.0
    %v807 = vpack.c.bf16 %v806, %v806
    %v808 = vld [vmem:[#allocation7] sm:$0xf]
    %v809 = vld [vmem:[#allocation7 + $0x4] sm:$0xf]
    %v810 = vld [vmem:[#allocation7 + $0x8] sm:$0xf]
    %v811 = vld [vmem:[#allocation7 + $0xc] sm:$0xf]
    %v812 = vld [vmem:[#allocation7 + $0x10] sm:$0xf]
    %v813 = vld [vmem:[#allocation7 + $0x14] sm:$0xf]
    %v814 = vld [vmem:[#allocation7 + $0x18] sm:$0xf]
    %v815 = vld [vmem:[#allocation7 + $0x1c] sm:$0xf]
    %v816 = vld [vmem:[#allocation7 + $0x20] sm:$0xf]
    %v817 = vld [vmem:[#allocation7 + $0x24] sm:$0xf]
    %v818 = vld [vmem:[#allocation7 + $0x28] sm:$0xf]
    %v819 = vld [vmem:[#allocation7 + $0x2c] sm:$0xf]
    %v820 = vld [vmem:[#allocation7 + $0x30] sm:$0xf]
    %v821 = vld [vmem:[#allocation7 + $0x34] sm:$0xf]
    %v822 = vld [vmem:[#allocation7 + $0x38] sm:$0xf]
    %v823 = vld [vmem:[#allocation7 + $0x3c] sm:$0xf]
    %v824 = vld [vmem:[%s4 + $0x1] sm:$0x1]
    %v825 = vlaneseq
    %v826 = vshrl.u32 %v825, 7
    %v827 = vsub.s32 0, %v826
    %v828 = vrot.slane %v824, %v827
    %v845 = vunpack.c.l.b16 %v808
    %v846 = vunpack.c.l.b16 %v809
    %v847 = vunpack.c.l.b16 %v810
    %v848 = vunpack.c.l.b16 %v811
    %v849 = vunpack.c.l.b16 %v812
    %v850 = vunpack.c.l.b16 %v813
    %v851 = vunpack.c.l.b16 %v814
    %v852 = vunpack.c.l.b16 %v815
    %v853 = vunpack.c.l.b16 %v816
    %v854 = vunpack.c.l.b16 %v817
    %v855 = vunpack.c.l.b16 %v818
    %v856 = vunpack.c.l.b16 %v819
    %v857 = vunpack.c.l.b16 %v820
    %v858 = vunpack.c.l.b16 %v821
    %v859 = vunpack.c.l.b16 %v822
    %v860 = vunpack.c.l.b16 %v823
    %v861 = vpack.c.b16 %v846, %v845
    %v862 = vpack.c.b16 %v848, %v847
    %v863 = vpack.c.b16 %v850, %v849
    %v864 = vpack.c.b16 %v852, %v851
    %v865 = vpack.c.b16 %v854, %v853
    %v866 = vpack.c.b16 %v856, %v855
    %v867 = vpack.c.b16 %v858, %v857
    %v868 = vpack.c.b16 %v860, %v859
    %877 = vmatprep.subr.bf16.mxu0 0
    %878 = vmatpush1.bf16.msra.mxu0 %v868
    %879 = vmatprep.subr.bf16.mxu0 0
    %880 = vmatpush1.bf16.msra.mxu0 %v867
    %881 = vmatprep.subr.bf16.mxu0 0
    %882 = vmatpush1.bf16.msra.mxu0 %v866
    %883 = vmatprep.subr.bf16.mxu0 0
    %884 = vmatpush1.bf16.msra.mxu0 %v865
    %885 = vmatprep.subr.bf16.mxu0 0
    %886 = vmatpush1.bf16.msra.mxu0 %v864
    %887 = vmatprep.subr.bf16.mxu0 0
    %888 = vmatpush1.bf16.msra.mxu0 %v863
    %889 = vmatprep.subr.bf16.mxu0 0
    %890 = vmatpush1.bf16.msra.mxu0 %v862
    %891 = vmatprep.subr.bf16.mxu0 0
    %892 = vmatpush1.bf16.msra.mxu0 %v861
    %893 = vmatprep.subr.bf16.mxu0 0
    %894 = vmatpush2.bf16.msra.mxu0 0
    %895 = vmatprep.subr.bf16.mxu0 0
    %896 = vmatpush2.bf16.msra.mxu0 0
    %897 = vmatprep.subr.bf16.mxu0 0
    %898 = vmatpush2.bf16.msra.mxu0 0
    %899 = vmatprep.subr.bf16.mxu0 0
    %900 = vmatpush2.bf16.msra.mxu0 0
    %901 = vmatprep.subr.bf16.mxu0 0
    %902 = vmatpush2.bf16.msra.mxu0 0
    %903 = vmatprep.subr.bf16.mxu0 0
    %904 = vmatpush2.bf16.msra.mxu0 0
    %905 = vmatprep.subr.bf16.mxu0 0
    %906 = vmatpush2.bf16.msra.mxu0 0
    %907 = vmatprep.subr.bf16.mxu0 0
    %908 = vmatpush2.bf16.msra.mxu0 0
    %909 = vmatprep.mubr.bf16.mxu0 0
    %910 = vmatmul.mubr.bf16.gmra.mxu0 %v807
    %v911 = vpop.f32.mrf.mxu0
    %v912 = vadd.f32 %v828, %v911
    %v913 = vpop.f32.mrf.mxu0
    %v914 = vpop.f32.mrf.mxu0
    %v915 = vpop.f32.mrf.mxu0
    %916 = vdwg.mxu0
    %v917 = vmax.f32 %v912, 0.0
    %v918 = vpack.c.bf16 %v917, %v917
    %v919 = vld [vmem:[#allocation8] sm:$0xf]
    %v920 = vld [vmem:[#allocation8 + $0x4] sm:$0xf]
    %v921 = vld [vmem:[#allocation8 + $0x8] sm:$0xf]
    %v922 = vld [vmem:[#allocation8 + $0xc] sm:$0xf]
    %v923 = vld [vmem:[#allocation8 + $0x10] sm:$0xf]
    %v924 = vld [vmem:[#allocation8 + $0x14] sm:$0xf]
    %v925 = vld [vmem:[#allocation8 + $0x18] sm:$0xf]
    %v926 = vld [vmem:[#allocation8 + $0x1c] sm:$0xf]
    %v927 = vld [vmem:[#allocation8 + $0x20] sm:$0xf]
    %v928 = vld [vmem:[#allocation8 + $0x24] sm:$0xf]
    %v929 = vld [vmem:[#allocation8 + $0x28] sm:$0xf]
    %v930 = vld [vmem:[#allocation8 + $0x2c] sm:$0xf]
    %v931 = vld [vmem:[#allocation8 + $0x30] sm:$0xf]
    %v932 = vld [vmem:[#allocation8 + $0x34] sm:$0xf]
    %v933 = vld [vmem:[#allocation8 + $0x38] sm:$0xf]
    %v934 = vld [vmem:[#allocation8 + $0x3c] sm:$0xf]
    %v935 = vld [vmem:[%s4 + $0x2] sm:$0x1]
    %v936 = vlaneseq
    %v937 = vshrl.u32 %v936, 7
    %v938 = vsub.s32 0, %v937
    %v939 = vrot.slane %v935, %v938
    %v956 = vunpack.c.l.b16 %v919
    %v957 = vunpack.c.l.b16 %v920
    %v958 = vunpack.c.l.b16 %v921
    %v959 = vunpack.c.l.b16 %v922
    %v960 = vunpack.c.l.b16 %v923
    %v961 = vunpack.c.l.b16 %v924
    %v962 = vunpack.c.l.b16 %v925
    %v963 = vunpack.c.l.b16 %v926
    %v964 = vunpack.c.l.b16 %v927
    %v965 = vunpack.c.l.b16 %v928
    %v966 = vunpack.c.l.b16 %v929
    %v967 = vunpack.c.l.b16 %v930
    %v968 = vunpack.c.l.b16 %v931
    %v969 = vunpack.c.l.b16 %v932
    %v970 = vunpack.c.l.b16 %v933
    %v971 = vunpack.c.l.b16 %v934
    %v972 = vpack.c.b16 %v957, %v956
    %v973 = vpack.c.b16 %v959, %v958
    %v974 = vpack.c.b16 %v961, %v960
    %v975 = vpack.c.b16 %v963, %v962
    %v976 = vpack.c.b16 %v965, %v964
    %v977 = vpack.c.b16 %v967, %v966
    %v978 = vpack.c.b16 %v969, %v968
    %v979 = vpack.c.b16 %v971, %v970
    %988 = vmatprep.subr.bf16.mxu0 0
    %989 = vmatpush1.bf16.msra.mxu0 %v979
    %990 = vmatprep.subr.bf16.mxu0 0
    %991 = vmatpush1.bf16.msra.mxu0 %v978
    %992 = vmatprep.subr.bf16.mxu0 0
    %993 = vmatpush1.bf16.msra.mxu0 %v977
    %994 = vmatprep.subr.bf16.mxu0 0
    %995 = vmatpush1.bf16.msra.mxu0 %v976
    %996 = vmatprep.subr.bf16.mxu0 0
    %997 = vmatpush1.bf16.msra.mxu0 %v975
    %998 = vmatprep.subr.bf16.mxu0 0
    %999 = vmatpush1.bf16.msra.mxu0 %v974
    %1000 = vmatprep.subr.bf16.mxu0 0
    %1001 = vmatpush1.bf16.msra.mxu0 %v973
    %1002 = vmatprep.subr.bf16.mxu0 0
    %1003 = vmatpush1.bf16.msra.mxu0 %v972
    %1004 = vmatprep.subr.bf16.mxu0 0
    %1005 = vmatpush2.bf16.msra.mxu0 0
    %1006 = vmatprep.subr.bf16.mxu0 0
    %1007 = vmatpush2.bf16.msra.mxu0 0
    %1008 = vmatprep.subr.bf16.mxu0 0
    %1009 = vmatpush2.bf16.msra.mxu0 0
    %1010 = vmatprep.subr.bf16.mxu0 0
    %1011 = vmatpush2.bf16.msra.mxu0 0
    %1012 = vmatprep.subr.bf16.mxu0 0
    %1013 = vmatpush2.bf16.msra.mxu0 0
    %1014 = vmatprep.subr.bf16.mxu0 0
    %1015 = vmatpush2.bf16.msra.mxu0 0
    %1016 = vmatprep.subr.bf16.mxu0 0
    %1017 = vmatpush2.bf16.msra.mxu0 0
    %1018 = vmatprep.subr.bf16.mxu0 0
    %1019 = vmatpush2.bf16.msra.mxu0 0
    %1020 = vmatprep.mubr.bf16.mxu0 0
    %1021 = vmatmul.mubr.bf16.gmra.mxu0 %v918
    %v1022 = vpop.f32.mrf.mxu0
    %v1023 = vadd.f32 %v939, %v1022
    %v1024 = vpop.f32.mrf.mxu0
    %v1025 = vpop.f32.mrf.mxu0
    %v1026 = vpop.f32.mrf.mxu0
    %1027 = vdwg.mxu0
    %v1028 = vmax.f32 %v1023, 0.0
    %1029 = vst [vmem:[#allocation10] sm:$0x3] %v1028
    // Predicated region
    $region38: #{tpu_custom_call.1} parent=1 // pred_check
      _
    $region39: #{tpu_custom_call.1} parent=1 // pred_check_branch
      %1031 = sbr.rel (0) target = $region41
    $region40: #{tpu_custom_call.1} parent=1 // pred_region
      %s1033 = ssub.s32 32, 32
      %1034 = vsyncadd [#allocation4], %s1033
      %s1036 = sshll.u32 [#allocation10], 4
      %s1037 = int_to_ptr.vmem [resolvable:$true] %s1036
      %1039 = dma.vmem_to_hbm [thread:$0]  %s1037, 32, %s5, [#allocation4]
    $region41: #{tpu_custom_call.1} parent=1 // pred_fallthru
      _
    // Predicated region
    $region42: #{tpu_custom_call.1} parent=1 // pred_check
      _
    $region43: #{tpu_custom_call.1} parent=1 // pred_check_branch
      %1041 = sbr.rel (0) target = $region45
    $region44: #{tpu_custom_call.1} parent=1 // pred_region
      %1042 = dma.done [#allocation4], 32
    $region45: #{tpu_custom_call.1} parent=1 // pred_fallthru
      _
    %1043 = vsyncpa [#allocation3], 1
    %1044 = vsyncpa [#allocation6], 1
    %1045 = vsyncpa [#allocation9], 1
    %1046 = vsyncpa [#allocation4], 1

</llo_original>
